<compile_context>
chip_gen: v6e
topology: v6e:2x2x1
jax: 0.10.0
libtpu: 0.0.40
codegen_flags: <defaults>
</compile_context>

<pallas_src>
import jax
import jax.numpy as jnp
from jax.experimental import pallas as pl
from jax.experimental.pallas import tpu as pltpu


def make_proposal_kernel(num_proposals: int, threshold: float):
    P = int(num_proposals)
    thr = float(threshold)

    def kernel(slab_ref, out_ref, count_ref):
        N = slab_ref.shape[1]
        ID_BITS = max(1, (N - 1).bit_length())      # lane id fits in low key bits
        ID_MASK = (1 << ID_BITS) - 1
        SENTINEL = jnp.int32(jnp.iinfo(jnp.int32).min)

        slab = slab_ref[...]                         # (16, N) f32

        # Individual row slices only -> never straddle an 8-sublane tile edge.
        m_bg = slab[0:1, :]
        m_fg = slab[1:2, :]
        dy = slab[2:3, :]
        dx = slab[3:4, :]
        dh = slab[4:5, :]
        dw = slab[5:6, :]
        ay1 = slab[8:9, :]
        ax1 = slab[9:10, :]
        ay2 = slab[10:11, :]
        ax2 = slab[11:12, :]

        # ---- ranking key (replaces softmax + per-step max/argmax pair) -----
        margin = m_fg - m_bg                         # monotone in fg softmax prob
        bits = pltpu.bitcast(margin, jnp.int32)
        # order-preserving signed-int image of the f32 margin
        mono = jnp.where(bits < 0, bits ^ jnp.int32(0x7FFFFFFF), bits)
        lane_ids = jax.lax.broadcasted_iota(jnp.int32, (1, N), 1)
        # high bits: quantized margin; low ID_BITS: reversed lane id so the
        # lowest lane wins exact-key ties.  One XLU max per NMS step.
        keys0 = (mono & jnp.int32(~ID_MASK)) | (ID_MASK - lane_ids)

        # ---- apply_box_deltas(anchors, bbox) --------------------------------
        h = ay2 - ay1
        w = ax2 - ax1
        cy = ay1 + 0.5 * h + dy * h
        cx = ax1 + 0.5 * w + dx * w
        h = h * jnp.exp(dh)
        w = w * jnp.exp(dw)
        y1 = cy - 0.5 * h
        x1 = cx - 0.5 * w
        y2 = y1 + h
        x2 = x1 + w
        areas = (y2 - y1) * (x2 - x1)                # reference area formula

        # Loop-invariant stacked copy feeding the single per-step gather-sum.
        boxes5 = jnp.concatenate([y1, x1, y2, x2, areas], axis=0)   # (5, N)

        prop_ids = jax.lax.broadcasted_iota(jnp.int32, (1, P), 1)

        # ---- greedy NMS: carry-resident, branchless, fully unrolled ---------
        def body(p, carry):
            keys, out, cnt = carry
            kmax = jnp.max(keys)                     # fused max + argmax
            active = kmax > SENTINEL                 # any unsuppressed lane?
            lane = ID_MASK - (kmax & ID_MASK)
            sel = lane_ids == lane                   # (1, N)

            # single gather: selected (y1, x1, y2, x2, area) -> (5, 1)
            col = jnp.sum(jnp.where(sel, boxes5, 0.0), axis=1, keepdims=True)
            sy1 = col[0:1, 0:1]
            sx1 = col[1:2, 0:1]
            sy2 = col[2:3, 0:1]
            sx2 = col[3:4, 0:1]
            sar = col[4:5, 0:1]

            # accumulate output column p in the (4, P) carry (stored once later)
            out = jnp.where(jnp.logical_and(prop_ids == p, active),
                            col[0:4, :], out)
            cnt = cnt + active.astype(jnp.int32)

            # IoU against all boxes; suppress overlaps > threshold and box i.
            yy1 = jnp.maximum(y1, sy1)
            xx1 = jnp.maximum(x1, sx1)
            yy2 = jnp.minimum(y2, sy2)
            xx2 = jnp.minimum(x2, sx2)
            iw = jnp.maximum(yy2 - yy1, 0.0)
            ih = jnp.maximum(xx2 - xx1, 0.0)
            inter = iw * ih
            union = sar + areas - inter
            ovr = inter / union                      # exact div (ref parity)
            keep = ovr <= thr                        # NaN -> drop, as in ref
            # When inactive the keys are already all-SENTINEL, so this update
            # is a harmless no-op -- no branch required.
            keys = jnp.where(keep & jnp.logical_not(sel), keys, SENTINEL)
            return keys, out, cnt

        out0 = jnp.zeros((4, P), jnp.float32)
        # P is small here; for num_proposals in the hundreds use unroll=False
        # or an early-exit while_loop instead.
        _, out, cnt = jax.lax.fori_loop(
            0, P, body, (keys0, out0, jnp.int32(0)), unroll=True)

        out_ref[...] = out                           # single store
        count_ref[0] = cnt

    return kernel


def proposal_forward(match, bbox, anchors, img_shape, num_proposals, threshold=0.6):
    """JAX/Pallas equivalent of Proposal.forward.

    match:   [N, 2]  (bg, fg) logits
    bbox:    [N, 4]  (dy, dx, log dh, log dw)
    anchors: [N, 4]  (y1, x1, y2, x2)
    Returns (proposals [num_proposals, 4], count [1]) -- count = number of
    valid rows (the reference returns a variable-length tensor).
    """
    del img_shape  # unused by the reference forward as well
    N = match.shape[0]
    zeros2 = jnp.zeros((2, N), jnp.float32)
    zeros4 = jnp.zeros((4, N), jnp.float32)
    # 16-row channel-major slab; anchors sit in rows 8-11 so every group lies
    # inside one 8-sublane tile.
    # TODO(synk): at real RPN anchor counts, have the producing layer emit
    # match/bbox channel-major and pre-store anchors as (4, N) so this
    # transpose+concat HBM pass disappears.
    slab = jnp.concatenate(
        [jnp.asarray(match, jnp.float32).T,          # rows 0-1   (bg, fg)
         jnp.asarray(bbox, jnp.float32).T,           # rows 2-5   (dy,dx,dh,dw)
         zeros2,                                     # rows 6-7   pad
         jnp.asarray(anchors, jnp.float32).T,        # rows 8-11  (y1,x1,y2,x2)
         zeros4],                                    # rows 12-15 pad
        axis=0)                                      # (16, N)

    kernel = make_proposal_kernel(num_proposals, threshold)
    out_t, count = pl.pallas_call(
        kernel,
        out_shape=(
            jax.ShapeDtypeStruct((4, num_proposals), jnp.float32),
            jax.ShapeDtypeStruct((1,), jnp.int32),
        ),
        in_specs=[pl.BlockSpec(memory_space=pltpu.MemorySpace.VMEM)],
        out_specs=(
            pl.BlockSpec(memory_space=pltpu.MemorySpace.VMEM),
            pl.BlockSpec(memory_space=pltpu.MemorySpace.SMEM),
        ),
    )(slab)
    return out_t.T, count


if __name__ == "__main__":
    key = jax.random.PRNGKey(0)
    k1, k2, k3, k4 = jax.random.split(key, 4)

    N = 256               # number of anchors (lane-aligned)
    num_proposals = 8
    img_shape = (16, 16)

    # deterministic synthetic inputs (no learnable params in the module)
    match = jax.random.normal(k1, (N, 2), dtype=jnp.float32)        # (bg, fg) logits
    bbox = 0.1 * jax.random.normal(k2, (N, 4), dtype=jnp.float32)   # refinement deltas
    ctr = jax.random.uniform(k3, (N, 2), minval=4.0, maxval=12.0)
    sz = jax.random.uniform(k4, (N, 2), minval=2.0, maxval=6.0)
    anchors = jnp.concatenate([ctr - 0.5 * sz, ctr + 0.5 * sz], axis=1)  # (y1,x1,y2,x2)

    proposals, count = proposal_forward(match, bbox, anchors, img_shape, num_proposals)
    jax.block_until_ready((proposals, count))
    # TODO(synk): reference returns a dynamically sized [rois, 4]; here rows
    # beyond count[0] are zero-padded because TPU output shapes must be static.
    print("KERNEL_OK")
</pallas_src>

<mosaic_0001>
module attributes {stable_mosaic.version = 11 : i64} {
  func.func @kernel(%arg0: memref<16x256xf32, #tpu.memory_space<vmem>>, %arg1: memref<4x8xf32, #tpu.memory_space<vmem>>, %arg2: memref<1xi32, #tpu.memory_space<smem>>) attributes {dimension_semantics = [], scalar_prefetch = 0 : i64, scratch_operands = 0 : i64, tpu.core_type = #tpu.core_type<tc>} {
    %c0 = arith.constant 0 : index
    %c0_0 = arith.constant 0 : index
    %0 = vector.load %arg0[%c0, %c0_0] : memref<16x256xf32, #tpu.memory_space<vmem>>, vector<16x256xf32>
    %1 = vector.extract_strided_slice %0 {offsets = [0, 0], sizes = [1, 256], strides = [1, 1]} : vector<16x256xf32> to vector<1x256xf32>
    %2 = vector.extract_strided_slice %0 {offsets = [1, 0], sizes = [1, 256], strides = [1, 1]} : vector<16x256xf32> to vector<1x256xf32>
    %3 = vector.extract_strided_slice %0 {offsets = [2, 0], sizes = [1, 256], strides = [1, 1]} : vector<16x256xf32> to vector<1x256xf32>
    %4 = vector.extract_strided_slice %0 {offsets = [3, 0], sizes = [1, 256], strides = [1, 1]} : vector<16x256xf32> to vector<1x256xf32>
    %5 = vector.extract_strided_slice %0 {offsets = [4, 0], sizes = [1, 256], strides = [1, 1]} : vector<16x256xf32> to vector<1x256xf32>
    %6 = vector.extract_strided_slice %0 {offsets = [5, 0], sizes = [1, 256], strides = [1, 1]} : vector<16x256xf32> to vector<1x256xf32>
    %7 = vector.extract_strided_slice %0 {offsets = [8, 0], sizes = [1, 256], strides = [1, 1]} : vector<16x256xf32> to vector<1x256xf32>
    %8 = vector.extract_strided_slice %0 {offsets = [9, 0], sizes = [1, 256], strides = [1, 1]} : vector<16x256xf32> to vector<1x256xf32>
    %9 = vector.extract_strided_slice %0 {offsets = [10, 0], sizes = [1, 256], strides = [1, 1]} : vector<16x256xf32> to vector<1x256xf32>
    %10 = vector.extract_strided_slice %0 {offsets = [11, 0], sizes = [1, 256], strides = [1, 1]} : vector<16x256xf32> to vector<1x256xf32>
    %11 = arith.subf %2, %1 : vector<1x256xf32>
    %12 = tpu.bitcast %11 : vector<1x256xf32> -> vector<1x256xi32>
    %c0_i32 = arith.constant 0 : i32
    %13 = vector.broadcast %c0_i32 : i32 to vector<1x256xi32>
    %14 = arith.cmpi slt, %12, %13 : vector<1x256xi32>
    %c2147483647_i32 = arith.constant 2147483647 : i32
    %15 = vector.broadcast %c2147483647_i32 : i32 to vector<1x256xi32>
    %16 = arith.xori %12, %15 : vector<1x256xi32>
    %17 = arith.select %14, %16, %12 : vector<1x256xi1>, vector<1x256xi32>
    %18 = tpu.iota {dimensions = array<i32: 1>} : vector<1x256xi32>
    %c-256_i32 = arith.constant -256 : i32
    %19 = vector.broadcast %c-256_i32 : i32 to vector<1x256xi32>
    %20 = arith.andi %17, %19 : vector<1x256xi32>
    %c255_i32 = arith.constant 255 : i32
    %21 = vector.broadcast %c255_i32 : i32 to vector<1x256xi32>
    %22 = arith.subi %21, %18 : vector<1x256xi32>
    %23 = arith.ori %20, %22 : vector<1x256xi32>
    %24 = arith.subf %9, %7 : vector<1x256xf32>
    %25 = arith.subf %10, %8 : vector<1x256xf32>
    %cst = arith.constant 5.000000e-01 : f32
    %26 = vector.broadcast %cst : f32 to vector<1x256xf32>
    %27 = arith.mulf %26, %24 : vector<1x256xf32>
    %28 = arith.addf %7, %27 : vector<1x256xf32>
    %29 = arith.mulf %3, %24 : vector<1x256xf32>
    %30 = arith.addf %28, %29 : vector<1x256xf32>
    %cst_1 = arith.constant 5.000000e-01 : f32
    %31 = vector.broadcast %cst_1 : f32 to vector<1x256xf32>
    %32 = arith.mulf %31, %25 : vector<1x256xf32>
    %33 = arith.addf %8, %32 : vector<1x256xf32>
    %34 = arith.mulf %4, %25 : vector<1x256xf32>
    %35 = arith.addf %33, %34 : vector<1x256xf32>
    %36 = math.exp %5 : vector<1x256xf32>
    %37 = arith.mulf %24, %36 : vector<1x256xf32>
    %38 = math.exp %6 : vector<1x256xf32>
    %39 = arith.mulf %25, %38 : vector<1x256xf32>
    %cst_2 = arith.constant 5.000000e-01 : f32
    %40 = vector.broadcast %cst_2 : f32 to vector<1x256xf32>
    %41 = arith.mulf %40, %37 : vector<1x256xf32>
    %42 = arith.subf %30, %41 : vector<1x256xf32>
    %cst_3 = arith.constant 5.000000e-01 : f32
    %43 = vector.broadcast %cst_3 : f32 to vector<1x256xf32>
    %44 = arith.mulf %43, %39 : vector<1x256xf32>
    %45 = arith.subf %35, %44 : vector<1x256xf32>
    %46 = arith.addf %42, %37 : vector<1x256xf32>
    %47 = arith.addf %45, %39 : vector<1x256xf32>
    %48 = arith.subf %46, %42 : vector<1x256xf32>
    %49 = arith.subf %47, %45 : vector<1x256xf32>
    %50 = arith.mulf %48, %49 : vector<1x256xf32>
    %51 = tpu.concatenate %42, %45, %46, %47, %50 in 0 : vector<1x256xf32>, vector<1x256xf32>, vector<1x256xf32>, vector<1x256xf32>, vector<1x256xf32> -> vector<5x256xf32>
    %52 = tpu.iota {dimensions = array<i32: 1>} : vector<1x8xi32>
    %cst_4 = arith.constant 0.000000e+00 : f32
    %53 = vector.broadcast %cst_4 : f32 to vector<4x8xf32>
    %c-2147483648_i32 = arith.constant -2147483648 : i32
    %c0_i32_5 = arith.constant 0 : i32
    %c0_i32_6 = arith.constant 0 : i32
    %54 = vector.shape_cast %23 : vector<1x256xi32> to vector<1x1x256xi32>
    %cst_7 = arith.constant dense<-2147483648> : vector<1xi32>
    %55 = vector.multi_reduction <maxsi>, %54, %cst_7 [1, 2] : vector<1x1x256xi32> to vector<1xi32>
    %56 = vector.shape_cast %55 : vector<1xi32> to vector<1x1x1xi32>
    %57 = vector.extract %56[0, 0, 0] : i32 from vector<1x1x1xi32>
    %58 = arith.cmpi sgt, %57, %c-2147483648_i32 : i32
    %c255_i32_8 = arith.constant 255 : i32
    %59 = arith.andi %57, %c255_i32_8 : i32
    %c255_i32_9 = arith.constant 255 : i32
    %60 = arith.subi %c255_i32_9, %59 : i32
    %61 = vector.broadcast %60 : i32 to vector<1x256xi32>
    %62 = arith.cmpi eq, %18, %61 : vector<1x256xi32>
    %cst_10 = arith.constant 0.000000e+00 : f32
    %63 = vector.shape_cast %62 : vector<1x256xi1> to vector<1x256xi1>
    %64 = vector.broadcast %63 : vector<1x256xi1> to vector<5x256xi1>
    %65 = vector.broadcast %cst_10 : f32 to vector<5x256xf32>
    %66 = arith.select %64, %51, %65 : vector<5x256xi1>, vector<5x256xf32>
    %cst_11 = arith.constant dense<0.000000e+00> : vector<5xf32>
    %67 = vector.multi_reduction <add>, %66, %cst_11 [1] : vector<5x256xf32> to vector<5xf32>
    %68 = vector.shape_cast %67 : vector<5xf32> to vector<5x1xf32>
    %69 = vector.extract_strided_slice %68 {offsets = [0, 0], sizes = [1, 1], strides = [1, 1]} : vector<5x1xf32> to vector<1x1xf32>
    %70 = vector.extract_strided_slice %68 {offsets = [1, 0], sizes = [1, 1], strides = [1, 1]} : vector<5x1xf32> to vector<1x1xf32>
    %71 = vector.extract_strided_slice %68 {offsets = [2, 0], sizes = [1, 1], strides = [1, 1]} : vector<5x1xf32> to vector<1x1xf32>
    %72 = vector.extract_strided_slice %68 {offsets = [3, 0], sizes = [1, 1], strides = [1, 1]} : vector<5x1xf32> to vector<1x1xf32>
    %73 = vector.extract_strided_slice %68 {offsets = [4, 0], sizes = [1, 1], strides = [1, 1]} : vector<5x1xf32> to vector<1x1xf32>
    %74 = vector.broadcast %c0_i32_6 : i32 to vector<1x8xi32>
    %75 = arith.cmpi eq, %52, %74 : vector<1x8xi32>
    %76 = vector.broadcast %58 : i1 to vector<1x8xi1>
    %77 = arith.andi %75, %76 : vector<1x8xi1>
    %78 = vector.extract_strided_slice %68 {offsets = [0, 0], sizes = [4, 1], strides = [1, 1]} : vector<5x1xf32> to vector<4x1xf32>
    %79 = vector.shape_cast %77 : vector<1x8xi1> to vector<1x8xi1>
    %80 = vector.broadcast %79 : vector<1x8xi1> to vector<4x8xi1>
    %81 = vector.shape_cast %78 : vector<4x1xf32> to vector<4x1xf32>
    %82 = vector.broadcast %81 : vector<4x1xf32> to vector<4x8xf32>
    %83 = arith.select %80, %82, %53 : vector<4x8xi1>, vector<4x8xf32>
    %84 = arith.extui %58 : i1 to i32
    %85 = arith.addi %c0_i32_5, %84 : i32
    %86 = vector.broadcast %69 : vector<1x1xf32> to vector<1x256xf32>
    %87 = arith.maximumf %42, %86 : vector<1x256xf32>
    %88 = vector.broadcast %70 : vector<1x1xf32> to vector<1x256xf32>
    %89 = arith.maximumf %45, %88 : vector<1x256xf32>
    %90 = vector.broadcast %71 : vector<1x1xf32> to vector<1x256xf32>
    %91 = arith.minimumf %46, %90 : vector<1x256xf32>
    %92 = vector.broadcast %72 : vector<1x1xf32> to vector<1x256xf32>
    %93 = arith.minimumf %47, %92 : vector<1x256xf32>
    %94 = arith.subf %91, %87 : vector<1x256xf32>
    %cst_12 = arith.constant 0.000000e+00 : f32
    %95 = vector.broadcast %cst_12 : f32 to vector<1x256xf32>
    %96 = arith.maximumf %94, %95 : vector<1x256xf32>
    %97 = arith.subf %93, %89 : vector<1x256xf32>
    %cst_13 = arith.constant 0.000000e+00 : f32
    %98 = vector.broadcast %cst_13 : f32 to vector<1x256xf32>
    %99 = arith.maximumf %97, %98 : vector<1x256xf32>
    %100 = arith.mulf %96, %99 : vector<1x256xf32>
    %101 = vector.broadcast %73 : vector<1x1xf32> to vector<1x256xf32>
    %102 = arith.addf %101, %50 : vector<1x256xf32>
    %103 = arith.subf %102, %100 : vector<1x256xf32>
    %104 = arith.divf %100, %103 : vector<1x256xf32>
    %cst_14 = arith.constant 6.000000e-01 : f32
    %105 = vector.broadcast %cst_14 : f32 to vector<1x256xf32>
    %106 = arith.cmpf ole, %104, %105 : vector<1x256xf32>
    %cst_15 = arith.constant dense<true> : vector<1x256xi1>
    %107 = arith.xori %62, %cst_15 : vector<1x256xi1>
    %108 = arith.andi %106, %107 : vector<1x256xi1>
    %109 = vector.broadcast %c-2147483648_i32 : i32 to vector<1x256xi32>
    %110 = arith.select %108, %23, %109 : vector<1x256xi1>, vector<1x256xi32>
    %c1_i32 = arith.constant 1 : i32
    %111 = vector.shape_cast %110 : vector<1x256xi32> to vector<1x1x256xi32>
    %cst_16 = arith.constant dense<-2147483648> : vector<1xi32>
    %112 = vector.multi_reduction <maxsi>, %111, %cst_16 [1, 2] : vector<1x1x256xi32> to vector<1xi32>
    %113 = vector.shape_cast %112 : vector<1xi32> to vector<1x1x1xi32>
    %114 = vector.extract %113[0, 0, 0] : i32 from vector<1x1x1xi32>
    %115 = arith.cmpi sgt, %114, %c-2147483648_i32 : i32
    %c255_i32_17 = arith.constant 255 : i32
    %116 = arith.andi %114, %c255_i32_17 : i32
    %c255_i32_18 = arith.constant 255 : i32
    %117 = arith.subi %c255_i32_18, %116 : i32
    %118 = vector.broadcast %117 : i32 to vector<1x256xi32>
    %119 = arith.cmpi eq, %18, %118 : vector<1x256xi32>
    %cst_19 = arith.constant 0.000000e+00 : f32
    %120 = vector.shape_cast %119 : vector<1x256xi1> to vector<1x256xi1>
    %121 = vector.broadcast %120 : vector<1x256xi1> to vector<5x256xi1>
    %122 = vector.broadcast %cst_19 : f32 to vector<5x256xf32>
    %123 = arith.select %121, %51, %122 : vector<5x256xi1>, vector<5x256xf32>
    %cst_20 = arith.constant dense<0.000000e+00> : vector<5xf32>
    %124 = vector.multi_reduction <add>, %123, %cst_20 [1] : vector<5x256xf32> to vector<5xf32>
    %125 = vector.shape_cast %124 : vector<5xf32> to vector<5x1xf32>
    %126 = vector.extract_strided_slice %125 {offsets = [0, 0], sizes = [1, 1], strides = [1, 1]} : vector<5x1xf32> to vector<1x1xf32>
    %127 = vector.extract_strided_slice %125 {offsets = [1, 0], sizes = [1, 1], strides = [1, 1]} : vector<5x1xf32> to vector<1x1xf32>
    %128 = vector.extract_strided_slice %125 {offsets = [2, 0], sizes = [1, 1], strides = [1, 1]} : vector<5x1xf32> to vector<1x1xf32>
    %129 = vector.extract_strided_slice %125 {offsets = [3, 0], sizes = [1, 1], strides = [1, 1]} : vector<5x1xf32> to vector<1x1xf32>
    %130 = vector.extract_strided_slice %125 {offsets = [4, 0], sizes = [1, 1], strides = [1, 1]} : vector<5x1xf32> to vector<1x1xf32>
    %131 = vector.broadcast %c1_i32 : i32 to vector<1x8xi32>
    %132 = arith.cmpi eq, %52, %131 : vector<1x8xi32>
    %133 = vector.broadcast %115 : i1 to vector<1x8xi1>
    %134 = arith.andi %132, %133 : vector<1x8xi1>
    %135 = vector.extract_strided_slice %125 {offsets = [0, 0], sizes = [4, 1], strides = [1, 1]} : vector<5x1xf32> to vector<4x1xf32>
    %136 = vector.shape_cast %134 : vector<1x8xi1> to vector<1x8xi1>
    %137 = vector.broadcast %136 : vector<1x8xi1> to vector<4x8xi1>
    %138 = vector.shape_cast %135 : vector<4x1xf32> to vector<4x1xf32>
    %139 = vector.broadcast %138 : vector<4x1xf32> to vector<4x8xf32>
    %140 = arith.select %137, %139, %83 : vector<4x8xi1>, vector<4x8xf32>
    %141 = arith.extui %115 : i1 to i32
    %142 = arith.addi %85, %141 : i32
    %143 = vector.broadcast %126 : vector<1x1xf32> to vector<1x256xf32>
    %144 = arith.maximumf %42, %143 : vector<1x256xf32>
    %145 = vector.broadcast %127 : vector<1x1xf32> to vector<1x256xf32>
    %146 = arith.maximumf %45, %145 : vector<1x256xf32>
    %147 = vector.broadcast %128 : vector<1x1xf32> to vector<1x256xf32>
    %148 = arith.minimumf %46, %147 : vector<1x256xf32>
    %149 = vector.broadcast %129 : vector<1x1xf32> to vector<1x256xf32>
    %150 = arith.minimumf %47, %149 : vector<1x256xf32>
    %151 = arith.subf %148, %144 : vector<1x256xf32>
    %cst_21 = arith.constant 0.000000e+00 : f32
    %152 = vector.broadcast %cst_21 : f32 to vector<1x256xf32>
    %153 = arith.maximumf %151, %152 : vector<1x256xf32>
    %154 = arith.subf %150, %146 : vector<1x256xf32>
    %cst_22 = arith.constant 0.000000e+00 : f32
    %155 = vector.broadcast %cst_22 : f32 to vector<1x256xf32>
    %156 = arith.maximumf %154, %155 : vector<1x256xf32>
    %157 = arith.mulf %153, %156 : vector<1x256xf32>
    %158 = vector.broadcast %130 : vector<1x1xf32> to vector<1x256xf32>
    %159 = arith.addf %158, %50 : vector<1x256xf32>
    %160 = arith.subf %159, %157 : vector<1x256xf32>
    %161 = arith.divf %157, %160 : vector<1x256xf32>
    %cst_23 = arith.constant 6.000000e-01 : f32
    %162 = vector.broadcast %cst_23 : f32 to vector<1x256xf32>
    %163 = arith.cmpf ole, %161, %162 : vector<1x256xf32>
    %cst_24 = arith.constant dense<true> : vector<1x256xi1>
    %164 = arith.xori %119, %cst_24 : vector<1x256xi1>
    %165 = arith.andi %163, %164 : vector<1x256xi1>
    %166 = vector.broadcast %c-2147483648_i32 : i32 to vector<1x256xi32>
    %167 = arith.select %165, %110, %166 : vector<1x256xi1>, vector<1x256xi32>
    %c2_i32 = arith.constant 2 : i32
    %168 = vector.shape_cast %167 : vector<1x256xi32> to vector<1x1x256xi32>
    %cst_25 = arith.constant dense<-2147483648> : vector<1xi32>
    %169 = vector.multi_reduction <maxsi>, %168, %cst_25 [1, 2] : vector<1x1x256xi32> to vector<1xi32>
    %170 = vector.shape_cast %169 : vector<1xi32> to vector<1x1x1xi32>
    %171 = vector.extract %170[0, 0, 0] : i32 from vector<1x1x1xi32>
    %172 = arith.cmpi sgt, %171, %c-2147483648_i32 : i32
    %c255_i32_26 = arith.constant 255 : i32
    %173 = arith.andi %171, %c255_i32_26 : i32
    %c255_i32_27 = arith.constant 255 : i32
    %174 = arith.subi %c255_i32_27, %173 : i32
    %175 = vector.broadcast %174 : i32 to vector<1x256xi32>
    %176 = arith.cmpi eq, %18, %175 : vector<1x256xi32>
    %cst_28 = arith.constant 0.000000e+00 : f32
    %177 = vector.shape_cast %176 : vector<1x256xi1> to vector<1x256xi1>
    %178 = vector.broadcast %177 : vector<1x256xi1> to vector<5x256xi1>
    %179 = vector.broadcast %cst_28 : f32 to vector<5x256xf32>
    %180 = arith.select %178, %51, %179 : vector<5x256xi1>, vector<5x256xf32>
    %cst_29 = arith.constant dense<0.000000e+00> : vector<5xf32>
    %181 = vector.multi_reduction <add>, %180, %cst_29 [1] : vector<5x256xf32> to vector<5xf32>
    %182 = vector.shape_cast %181 : vector<5xf32> to vector<5x1xf32>
    %183 = vector.extract_strided_slice %182 {offsets = [0, 0], sizes = [1, 1], strides = [1, 1]} : vector<5x1xf32> to vector<1x1xf32>
    %184 = vector.extract_strided_slice %182 {offsets = [1, 0], sizes = [1, 1], strides = [1, 1]} : vector<5x1xf32> to vector<1x1xf32>
    %185 = vector.extract_strided_slice %182 {offsets = [2, 0], sizes = [1, 1], strides = [1, 1]} : vector<5x1xf32> to vector<1x1xf32>
    %186 = vector.extract_strided_slice %182 {offsets = [3, 0], sizes = [1, 1], strides = [1, 1]} : vector<5x1xf32> to vector<1x1xf32>
    %187 = vector.extract_strided_slice %182 {offsets = [4, 0], sizes = [1, 1], strides = [1, 1]} : vector<5x1xf32> to vector<1x1xf32>
    %188 = vector.broadcast %c2_i32 : i32 to vector<1x8xi32>
    %189 = arith.cmpi eq, %52, %188 : vector<1x8xi32>
    %190 = vector.broadcast %172 : i1 to vector<1x8xi1>
    %191 = arith.andi %189, %190 : vector<1x8xi1>
    %192 = vector.extract_strided_slice %182 {offsets = [0, 0], sizes = [4, 1], strides = [1, 1]} : vector<5x1xf32> to vector<4x1xf32>
    %193 = vector.shape_cast %191 : vector<1x8xi1> to vector<1x8xi1>
    %194 = vector.broadcast %193 : vector<1x8xi1> to vector<4x8xi1>
    %195 = vector.shape_cast %192 : vector<4x1xf32> to vector<4x1xf32>
    %196 = vector.broadcast %195 : vector<4x1xf32> to vector<4x8xf32>
    %197 = arith.select %194, %196, %140 : vector<4x8xi1>, vector<4x8xf32>
    %198 = arith.extui %172 : i1 to i32
    %199 = arith.addi %142, %198 : i32
    %200 = vector.broadcast %183 : vector<1x1xf32> to vector<1x256xf32>
    %201 = arith.maximumf %42, %200 : vector<1x256xf32>
    %202 = vector.broadcast %184 : vector<1x1xf32> to vector<1x256xf32>
    %203 = arith.maximumf %45, %202 : vector<1x256xf32>
    %204 = vector.broadcast %185 : vector<1x1xf32> to vector<1x256xf32>
    %205 = arith.minimumf %46, %204 : vector<1x256xf32>
    %206 = vector.broadcast %186 : vector<1x1xf32> to vector<1x256xf32>
    %207 = arith.minimumf %47, %206 : vector<1x256xf32>
    %208 = arith.subf %205, %201 : vector<1x256xf32>
    %cst_30 = arith.constant 0.000000e+00 : f32
    %209 = vector.broadcast %cst_30 : f32 to vector<1x256xf32>
    %210 = arith.maximumf %208, %209 : vector<1x256xf32>
    %211 = arith.subf %207, %203 : vector<1x256xf32>
    %cst_31 = arith.constant 0.000000e+00 : f32
    %212 = vector.broadcast %cst_31 : f32 to vector<1x256xf32>
    %213 = arith.maximumf %211, %212 : vector<1x256xf32>
    %214 = arith.mulf %210, %213 : vector<1x256xf32>
    %215 = vector.broadcast %187 : vector<1x1xf32> to vector<1x256xf32>
    %216 = arith.addf %215, %50 : vector<1x256xf32>
    %217 = arith.subf %216, %214 : vector<1x256xf32>
    %218 = arith.divf %214, %217 : vector<1x256xf32>
    %cst_32 = arith.constant 6.000000e-01 : f32
    %219 = vector.broadcast %cst_32 : f32 to vector<1x256xf32>
    %220 = arith.cmpf ole, %218, %219 : vector<1x256xf32>
    %cst_33 = arith.constant dense<true> : vector<1x256xi1>
    %221 = arith.xori %176, %cst_33 : vector<1x256xi1>
    %222 = arith.andi %220, %221 : vector<1x256xi1>
    %223 = vector.broadcast %c-2147483648_i32 : i32 to vector<1x256xi32>
    %224 = arith.select %222, %167, %223 : vector<1x256xi1>, vector<1x256xi32>
    %c3_i32 = arith.constant 3 : i32
    %225 = vector.shape_cast %224 : vector<1x256xi32> to vector<1x1x256xi32>
    %cst_34 = arith.constant dense<-2147483648> : vector<1xi32>
    %226 = vector.multi_reduction <maxsi>, %225, %cst_34 [1, 2] : vector<1x1x256xi32> to vector<1xi32>
    %227 = vector.shape_cast %226 : vector<1xi32> to vector<1x1x1xi32>
    %228 = vector.extract %227[0, 0, 0] : i32 from vector<1x1x1xi32>
    %229 = arith.cmpi sgt, %228, %c-2147483648_i32 : i32
    %c255_i32_35 = arith.constant 255 : i32
    %230 = arith.andi %228, %c255_i32_35 : i32
    %c255_i32_36 = arith.constant 255 : i32
    %231 = arith.subi %c255_i32_36, %230 : i32
    %232 = vector.broadcast %231 : i32 to vector<1x256xi32>
    %233 = arith.cmpi eq, %18, %232 : vector<1x256xi32>
    %cst_37 = arith.constant 0.000000e+00 : f32
    %234 = vector.shape_cast %233 : vector<1x256xi1> to vector<1x256xi1>
    %235 = vector.broadcast %234 : vector<1x256xi1> to vector<5x256xi1>
    %236 = vector.broadcast %cst_37 : f32 to vector<5x256xf32>
    %237 = arith.select %235, %51, %236 : vector<5x256xi1>, vector<5x256xf32>
    %cst_38 = arith.constant dense<0.000000e+00> : vector<5xf32>
    %238 = vector.multi_reduction <add>, %237, %cst_38 [1] : vector<5x256xf32> to vector<5xf32>
    %239 = vector.shape_cast %238 : vector<5xf32> to vector<5x1xf32>
    %240 = vector.extract_strided_slice %239 {offsets = [0, 0], sizes = [1, 1], strides = [1, 1]} : vector<5x1xf32> to vector<1x1xf32>
    %241 = vector.extract_strided_slice %239 {offsets = [1, 0], sizes = [1, 1], strides = [1, 1]} : vector<5x1xf32> to vector<1x1xf32>
    %242 = vector.extract_strided_slice %239 {offsets = [2, 0], sizes = [1, 1], strides = [1, 1]} : vector<5x1xf32> to vector<1x1xf32>
    %243 = vector.extract_strided_slice %239 {offsets = [3, 0], sizes = [1, 1], strides = [1, 1]} : vector<5x1xf32> to vector<1x1xf32>
    %244 = vector.extract_strided_slice %239 {offsets = [4, 0], sizes = [1, 1], strides = [1, 1]} : vector<5x1xf32> to vector<1x1xf32>
    %245 = vector.broadcast %c3_i32 : i32 to vector<1x8xi32>
    %246 = arith.cmpi eq, %52, %245 : vector<1x8xi32>
    %247 = vector.broadcast %229 : i1 to vector<1x8xi1>
    %248 = arith.andi %246, %247 : vector<1x8xi1>
    %249 = vector.extract_strided_slice %239 {offsets = [0, 0], sizes = [4, 1], strides = [1, 1]} : vector<5x1xf32> to vector<4x1xf32>
    %250 = vector.shape_cast %248 : vector<1x8xi1> to vector<1x8xi1>
    %251 = vector.broadcast %250 : vector<1x8xi1> to vector<4x8xi1>
    %252 = vector.shape_cast %249 : vector<4x1xf32> to vector<4x1xf32>
    %253 = vector.broadcast %252 : vector<4x1xf32> to vector<4x8xf32>
    %254 = arith.select %251, %253, %197 : vector<4x8xi1>, vector<4x8xf32>
    %255 = arith.extui %229 : i1 to i32
    %256 = arith.addi %199, %255 : i32
    %257 = vector.broadcast %240 : vector<1x1xf32> to vector<1x256xf32>
    %258 = arith.maximumf %42, %257 : vector<1x256xf32>
    %259 = vector.broadcast %241 : vector<1x1xf32> to vector<1x256xf32>
    %260 = arith.maximumf %45, %259 : vector<1x256xf32>
    %261 = vector.broadcast %242 : vector<1x1xf32> to vector<1x256xf32>
    %262 = arith.minimumf %46, %261 : vector<1x256xf32>
    %263 = vector.broadcast %243 : vector<1x1xf32> to vector<1x256xf32>
    %264 = arith.minimumf %47, %263 : vector<1x256xf32>
    %265 = arith.subf %262, %258 : vector<1x256xf32>
    %cst_39 = arith.constant 0.000000e+00 : f32
    %266 = vector.broadcast %cst_39 : f32 to vector<1x256xf32>
    %267 = arith.maximumf %265, %266 : vector<1x256xf32>
    %268 = arith.subf %264, %260 : vector<1x256xf32>
    %cst_40 = arith.constant 0.000000e+00 : f32
    %269 = vector.broadcast %cst_40 : f32 to vector<1x256xf32>
    %270 = arith.maximumf %268, %269 : vector<1x256xf32>
    %271 = arith.mulf %267, %270 : vector<1x256xf32>
    %272 = vector.broadcast %244 : vector<1x1xf32> to vector<1x256xf32>
    %273 = arith.addf %272, %50 : vector<1x256xf32>
    %274 = arith.subf %273, %271 : vector<1x256xf32>
    %275 = arith.divf %271, %274 : vector<1x256xf32>
    %cst_41 = arith.constant 6.000000e-01 : f32
    %276 = vector.broadcast %cst_41 : f32 to vector<1x256xf32>
    %277 = arith.cmpf ole, %275, %276 : vector<1x256xf32>
    %cst_42 = arith.constant dense<true> : vector<1x256xi1>
    %278 = arith.xori %233, %cst_42 : vector<1x256xi1>
    %279 = arith.andi %277, %278 : vector<1x256xi1>
    %280 = vector.broadcast %c-2147483648_i32 : i32 to vector<1x256xi32>
    %281 = arith.select %279, %224, %280 : vector<1x256xi1>, vector<1x256xi32>
    %c4_i32 = arith.constant 4 : i32
    %282 = vector.shape_cast %281 : vector<1x256xi32> to vector<1x1x256xi32>
    %cst_43 = arith.constant dense<-2147483648> : vector<1xi32>
    %283 = vector.multi_reduction <maxsi>, %282, %cst_43 [1, 2] : vector<1x1x256xi32> to vector<1xi32>
    %284 = vector.shape_cast %283 : vector<1xi32> to vector<1x1x1xi32>
    %285 = vector.extract %284[0, 0, 0] : i32 from vector<1x1x1xi32>
    %286 = arith.cmpi sgt, %285, %c-2147483648_i32 : i32
    %c255_i32_44 = arith.constant 255 : i32
    %287 = arith.andi %285, %c255_i32_44 : i32
    %c255_i32_45 = arith.constant 255 : i32
    %288 = arith.subi %c255_i32_45, %287 : i32
    %289 = vector.broadcast %288 : i32 to vector<1x256xi32>
    %290 = arith.cmpi eq, %18, %289 : vector<1x256xi32>
    %cst_46 = arith.constant 0.000000e+00 : f32
    %291 = vector.shape_cast %290 : vector<1x256xi1> to vector<1x256xi1>
    %292 = vector.broadcast %291 : vector<1x256xi1> to vector<5x256xi1>
    %293 = vector.broadcast %cst_46 : f32 to vector<5x256xf32>
    %294 = arith.select %292, %51, %293 : vector<5x256xi1>, vector<5x256xf32>
    %cst_47 = arith.constant dense<0.000000e+00> : vector<5xf32>
    %295 = vector.multi_reduction <add>, %294, %cst_47 [1] : vector<5x256xf32> to vector<5xf32>
    %296 = vector.shape_cast %295 : vector<5xf32> to vector<5x1xf32>
    %297 = vector.extract_strided_slice %296 {offsets = [0, 0], sizes = [1, 1], strides = [1, 1]} : vector<5x1xf32> to vector<1x1xf32>
    %298 = vector.extract_strided_slice %296 {offsets = [1, 0], sizes = [1, 1], strides = [1, 1]} : vector<5x1xf32> to vector<1x1xf32>
    %299 = vector.extract_strided_slice %296 {offsets = [2, 0], sizes = [1, 1], strides = [1, 1]} : vector<5x1xf32> to vector<1x1xf32>
    %300 = vector.extract_strided_slice %296 {offsets = [3, 0], sizes = [1, 1], strides = [1, 1]} : vector<5x1xf32> to vector<1x1xf32>
    %301 = vector.extract_strided_slice %296 {offsets = [4, 0], sizes = [1, 1], strides = [1, 1]} : vector<5x1xf32> to vector<1x1xf32>
    %302 = vector.broadcast %c4_i32 : i32 to vector<1x8xi32>
    %303 = arith.cmpi eq, %52, %302 : vector<1x8xi32>
    %304 = vector.broadcast %286 : i1 to vector<1x8xi1>
    %305 = arith.andi %303, %304 : vector<1x8xi1>
    %306 = vector.extract_strided_slice %296 {offsets = [0, 0], sizes = [4, 1], strides = [1, 1]} : vector<5x1xf32> to vector<4x1xf32>
    %307 = vector.shape_cast %305 : vector<1x8xi1> to vector<1x8xi1>
    %308 = vector.broadcast %307 : vector<1x8xi1> to vector<4x8xi1>
    %309 = vector.shape_cast %306 : vector<4x1xf32> to vector<4x1xf32>
    %310 = vector.broadcast %309 : vector<4x1xf32> to vector<4x8xf32>
    %311 = arith.select %308, %310, %254 : vector<4x8xi1>, vector<4x8xf32>
    %312 = arith.extui %286 : i1 to i32
    %313 = arith.addi %256, %312 : i32
    %314 = vector.broadcast %297 : vector<1x1xf32> to vector<1x256xf32>
    %315 = arith.maximumf %42, %314 : vector<1x256xf32>
    %316 = vector.broadcast %298 : vector<1x1xf32> to vector<1x256xf32>
    %317 = arith.maximumf %45, %316 : vector<1x256xf32>
    %318 = vector.broadcast %299 : vector<1x1xf32> to vector<1x256xf32>
    %319 = arith.minimumf %46, %318 : vector<1x256xf32>
    %320 = vector.broadcast %300 : vector<1x1xf32> to vector<1x256xf32>
    %321 = arith.minimumf %47, %320 : vector<1x256xf32>
    %322 = arith.subf %319, %315 : vector<1x256xf32>
    %cst_48 = arith.constant 0.000000e+00 : f32
    %323 = vector.broadcast %cst_48 : f32 to vector<1x256xf32>
    %324 = arith.maximumf %322, %323 : vector<1x256xf32>
    %325 = arith.subf %321, %317 : vector<1x256xf32>
    %cst_49 = arith.constant 0.000000e+00 : f32
    %326 = vector.broadcast %cst_49 : f32 to vector<1x256xf32>
    %327 = arith.maximumf %325, %326 : vector<1x256xf32>
    %328 = arith.mulf %324, %327 : vector<1x256xf32>
    %329 = vector.broadcast %301 : vector<1x1xf32> to vector<1x256xf32>
    %330 = arith.addf %329, %50 : vector<1x256xf32>
    %331 = arith.subf %330, %328 : vector<1x256xf32>
    %332 = arith.divf %328, %331 : vector<1x256xf32>
    %cst_50 = arith.constant 6.000000e-01 : f32
    %333 = vector.broadcast %cst_50 : f32 to vector<1x256xf32>
    %334 = arith.cmpf ole, %332, %333 : vector<1x256xf32>
    %cst_51 = arith.constant dense<true> : vector<1x256xi1>
    %335 = arith.xori %290, %cst_51 : vector<1x256xi1>
    %336 = arith.andi %334, %335 : vector<1x256xi1>
    %337 = vector.broadcast %c-2147483648_i32 : i32 to vector<1x256xi32>
    %338 = arith.select %336, %281, %337 : vector<1x256xi1>, vector<1x256xi32>
    %c5_i32 = arith.constant 5 : i32
    %339 = vector.shape_cast %338 : vector<1x256xi32> to vector<1x1x256xi32>
    %cst_52 = arith.constant dense<-2147483648> : vector<1xi32>
    %340 = vector.multi_reduction <maxsi>, %339, %cst_52 [1, 2] : vector<1x1x256xi32> to vector<1xi32>
    %341 = vector.shape_cast %340 : vector<1xi32> to vector<1x1x1xi32>
    %342 = vector.extract %341[0, 0, 0] : i32 from vector<1x1x1xi32>
    %343 = arith.cmpi sgt, %342, %c-2147483648_i32 : i32
    %c255_i32_53 = arith.constant 255 : i32
    %344 = arith.andi %342, %c255_i32_53 : i32
    %c255_i32_54 = arith.constant 255 : i32
    %345 = arith.subi %c255_i32_54, %344 : i32
    %346 = vector.broadcast %345 : i32 to vector<1x256xi32>
    %347 = arith.cmpi eq, %18, %346 : vector<1x256xi32>
    %cst_55 = arith.constant 0.000000e+00 : f32
    %348 = vector.shape_cast %347 : vector<1x256xi1> to vector<1x256xi1>
    %349 = vector.broadcast %348 : vector<1x256xi1> to vector<5x256xi1>
    %350 = vector.broadcast %cst_55 : f32 to vector<5x256xf32>
    %351 = arith.select %349, %51, %350 : vector<5x256xi1>, vector<5x256xf32>
    %cst_56 = arith.constant dense<0.000000e+00> : vector<5xf32>
    %352 = vector.multi_reduction <add>, %351, %cst_56 [1] : vector<5x256xf32> to vector<5xf32>
    %353 = vector.shape_cast %352 : vector<5xf32> to vector<5x1xf32>
    %354 = vector.extract_strided_slice %353 {offsets = [0, 0], sizes = [1, 1], strides = [1, 1]} : vector<5x1xf32> to vector<1x1xf32>
    %355 = vector.extract_strided_slice %353 {offsets = [1, 0], sizes = [1, 1], strides = [1, 1]} : vector<5x1xf32> to vector<1x1xf32>
    %356 = vector.extract_strided_slice %353 {offsets = [2, 0], sizes = [1, 1], strides = [1, 1]} : vector<5x1xf32> to vector<1x1xf32>
    %357 = vector.extract_strided_slice %353 {offsets = [3, 0], sizes = [1, 1], strides = [1, 1]} : vector<5x1xf32> to vector<1x1xf32>
    %358 = vector.extract_strided_slice %353 {offsets = [4, 0], sizes = [1, 1], strides = [1, 1]} : vector<5x1xf32> to vector<1x1xf32>
    %359 = vector.broadcast %c5_i32 : i32 to vector<1x8xi32>
    %360 = arith.cmpi eq, %52, %359 : vector<1x8xi32>
    %361 = vector.broadcast %343 : i1 to vector<1x8xi1>
    %362 = arith.andi %360, %361 : vector<1x8xi1>
    %363 = vector.extract_strided_slice %353 {offsets = [0, 0], sizes = [4, 1], strides = [1, 1]} : vector<5x1xf32> to vector<4x1xf32>
    %364 = vector.shape_cast %362 : vector<1x8xi1> to vector<1x8xi1>
    %365 = vector.broadcast %364 : vector<1x8xi1> to vector<4x8xi1>
    %366 = vector.shape_cast %363 : vector<4x1xf32> to vector<4x1xf32>
    %367 = vector.broadcast %366 : vector<4x1xf32> to vector<4x8xf32>
    %368 = arith.select %365, %367, %311 : vector<4x8xi1>, vector<4x8xf32>
    %369 = arith.extui %343 : i1 to i32
    %370 = arith.addi %313, %369 : i32
    %371 = vector.broadcast %354 : vector<1x1xf32> to vector<1x256xf32>
    %372 = arith.maximumf %42, %371 : vector<1x256xf32>
    %373 = vector.broadcast %355 : vector<1x1xf32> to vector<1x256xf32>
    %374 = arith.maximumf %45, %373 : vector<1x256xf32>
    %375 = vector.broadcast %356 : vector<1x1xf32> to vector<1x256xf32>
    %376 = arith.minimumf %46, %375 : vector<1x256xf32>
    %377 = vector.broadcast %357 : vector<1x1xf32> to vector<1x256xf32>
    %378 = arith.minimumf %47, %377 : vector<1x256xf32>
    %379 = arith.subf %376, %372 : vector<1x256xf32>
    %cst_57 = arith.constant 0.000000e+00 : f32
    %380 = vector.broadcast %cst_57 : f32 to vector<1x256xf32>
    %381 = arith.maximumf %379, %380 : vector<1x256xf32>
    %382 = arith.subf %378, %374 : vector<1x256xf32>
    %cst_58 = arith.constant 0.000000e+00 : f32
    %383 = vector.broadcast %cst_58 : f32 to vector<1x256xf32>
    %384 = arith.maximumf %382, %383 : vector<1x256xf32>
    %385 = arith.mulf %381, %384 : vector<1x256xf32>
    %386 = vector.broadcast %358 : vector<1x1xf32> to vector<1x256xf32>
    %387 = arith.addf %386, %50 : vector<1x256xf32>
    %388 = arith.subf %387, %385 : vector<1x256xf32>
    %389 = arith.divf %385, %388 : vector<1x256xf32>
    %cst_59 = arith.constant 6.000000e-01 : f32
    %390 = vector.broadcast %cst_59 : f32 to vector<1x256xf32>
    %391 = arith.cmpf ole, %389, %390 : vector<1x256xf32>
    %cst_60 = arith.constant dense<true> : vector<1x256xi1>
    %392 = arith.xori %347, %cst_60 : vector<1x256xi1>
    %393 = arith.andi %391, %392 : vector<1x256xi1>
    %394 = vector.broadcast %c-2147483648_i32 : i32 to vector<1x256xi32>
    %395 = arith.select %393, %338, %394 : vector<1x256xi1>, vector<1x256xi32>
    %c6_i32 = arith.constant 6 : i32
    %396 = vector.shape_cast %395 : vector<1x256xi32> to vector<1x1x256xi32>
    %cst_61 = arith.constant dense<-2147483648> : vector<1xi32>
    %397 = vector.multi_reduction <maxsi>, %396, %cst_61 [1, 2] : vector<1x1x256xi32> to vector<1xi32>
    %398 = vector.shape_cast %397 : vector<1xi32> to vector<1x1x1xi32>
    %399 = vector.extract %398[0, 0, 0] : i32 from vector<1x1x1xi32>
    %400 = arith.cmpi sgt, %399, %c-2147483648_i32 : i32
    %c255_i32_62 = arith.constant 255 : i32
    %401 = arith.andi %399, %c255_i32_62 : i32
    %c255_i32_63 = arith.constant 255 : i32
    %402 = arith.subi %c255_i32_63, %401 : i32
    %403 = vector.broadcast %402 : i32 to vector<1x256xi32>
    %404 = arith.cmpi eq, %18, %403 : vector<1x256xi32>
    %cst_64 = arith.constant 0.000000e+00 : f32
    %405 = vector.shape_cast %404 : vector<1x256xi1> to vector<1x256xi1>
    %406 = vector.broadcast %405 : vector<1x256xi1> to vector<5x256xi1>
    %407 = vector.broadcast %cst_64 : f32 to vector<5x256xf32>
    %408 = arith.select %406, %51, %407 : vector<5x256xi1>, vector<5x256xf32>
    %cst_65 = arith.constant dense<0.000000e+00> : vector<5xf32>
    %409 = vector.multi_reduction <add>, %408, %cst_65 [1] : vector<5x256xf32> to vector<5xf32>
    %410 = vector.shape_cast %409 : vector<5xf32> to vector<5x1xf32>
    %411 = vector.extract_strided_slice %410 {offsets = [0, 0], sizes = [1, 1], strides = [1, 1]} : vector<5x1xf32> to vector<1x1xf32>
    %412 = vector.extract_strided_slice %410 {offsets = [1, 0], sizes = [1, 1], strides = [1, 1]} : vector<5x1xf32> to vector<1x1xf32>
    %413 = vector.extract_strided_slice %410 {offsets = [2, 0], sizes = [1, 1], strides = [1, 1]} : vector<5x1xf32> to vector<1x1xf32>
    %414 = vector.extract_strided_slice %410 {offsets = [3, 0], sizes = [1, 1], strides = [1, 1]} : vector<5x1xf32> to vector<1x1xf32>
    %415 = vector.extract_strided_slice %410 {offsets = [4, 0], sizes = [1, 1], strides = [1, 1]} : vector<5x1xf32> to vector<1x1xf32>
    %416 = vector.broadcast %c6_i32 : i32 to vector<1x8xi32>
    %417 = arith.cmpi eq, %52, %416 : vector<1x8xi32>
    %418 = vector.broadcast %400 : i1 to vector<1x8xi1>
    %419 = arith.andi %417, %418 : vector<1x8xi1>
    %420 = vector.extract_strided_slice %410 {offsets = [0, 0], sizes = [4, 1], strides = [1, 1]} : vector<5x1xf32> to vector<4x1xf32>
    %421 = vector.shape_cast %419 : vector<1x8xi1> to vector<1x8xi1>
    %422 = vector.broadcast %421 : vector<1x8xi1> to vector<4x8xi1>
    %423 = vector.shape_cast %420 : vector<4x1xf32> to vector<4x1xf32>
    %424 = vector.broadcast %423 : vector<4x1xf32> to vector<4x8xf32>
    %425 = arith.select %422, %424, %368 : vector<4x8xi1>, vector<4x8xf32>
    %426 = arith.extui %400 : i1 to i32
    %427 = arith.addi %370, %426 : i32
    %428 = vector.broadcast %411 : vector<1x1xf32> to vector<1x256xf32>
    %429 = arith.maximumf %42, %428 : vector<1x256xf32>
    %430 = vector.broadcast %412 : vector<1x1xf32> to vector<1x256xf32>
    %431 = arith.maximumf %45, %430 : vector<1x256xf32>
    %432 = vector.broadcast %413 : vector<1x1xf32> to vector<1x256xf32>
    %433 = arith.minimumf %46, %432 : vector<1x256xf32>
    %434 = vector.broadcast %414 : vector<1x1xf32> to vector<1x256xf32>
    %435 = arith.minimumf %47, %434 : vector<1x256xf32>
    %436 = arith.subf %433, %429 : vector<1x256xf32>
    %cst_66 = arith.constant 0.000000e+00 : f32
    %437 = vector.broadcast %cst_66 : f32 to vector<1x256xf32>
    %438 = arith.maximumf %436, %437 : vector<1x256xf32>
    %439 = arith.subf %435, %431 : vector<1x256xf32>
    %cst_67 = arith.constant 0.000000e+00 : f32
    %440 = vector.broadcast %cst_67 : f32 to vector<1x256xf32>
    %441 = arith.maximumf %439, %440 : vector<1x256xf32>
    %442 = arith.mulf %438, %441 : vector<1x256xf32>
    %443 = vector.broadcast %415 : vector<1x1xf32> to vector<1x256xf32>
    %444 = arith.addf %443, %50 : vector<1x256xf32>
    %445 = arith.subf %444, %442 : vector<1x256xf32>
    %446 = arith.divf %442, %445 : vector<1x256xf32>
    %cst_68 = arith.constant 6.000000e-01 : f32
    %447 = vector.broadcast %cst_68 : f32 to vector<1x256xf32>
    %448 = arith.cmpf ole, %446, %447 : vector<1x256xf32>
    %cst_69 = arith.constant dense<true> : vector<1x256xi1>
    %449 = arith.xori %404, %cst_69 : vector<1x256xi1>
    %450 = arith.andi %448, %449 : vector<1x256xi1>
    %451 = vector.broadcast %c-2147483648_i32 : i32 to vector<1x256xi32>
    %452 = arith.select %450, %395, %451 : vector<1x256xi1>, vector<1x256xi32>
    %c7_i32 = arith.constant 7 : i32
    %453 = vector.shape_cast %452 : vector<1x256xi32> to vector<1x1x256xi32>
    %cst_70 = arith.constant dense<-2147483648> : vector<1xi32>
    %454 = vector.multi_reduction <maxsi>, %453, %cst_70 [1, 2] : vector<1x1x256xi32> to vector<1xi32>
    %455 = vector.shape_cast %454 : vector<1xi32> to vector<1x1x1xi32>
    %456 = vector.extract %455[0, 0, 0] : i32 from vector<1x1x1xi32>
    %457 = arith.cmpi sgt, %456, %c-2147483648_i32 : i32
    %c255_i32_71 = arith.constant 255 : i32
    %458 = arith.andi %456, %c255_i32_71 : i32
    %c255_i32_72 = arith.constant 255 : i32
    %459 = arith.subi %c255_i32_72, %458 : i32
    %460 = vector.broadcast %459 : i32 to vector<1x256xi32>
    %461 = arith.cmpi eq, %18, %460 : vector<1x256xi32>
    %cst_73 = arith.constant 0.000000e+00 : f32
    %462 = vector.shape_cast %461 : vector<1x256xi1> to vector<1x256xi1>
    %463 = vector.broadcast %462 : vector<1x256xi1> to vector<5x256xi1>
    %464 = vector.broadcast %cst_73 : f32 to vector<5x256xf32>
    %465 = arith.select %463, %51, %464 : vector<5x256xi1>, vector<5x256xf32>
    %cst_74 = arith.constant dense<0.000000e+00> : vector<5xf32>
    %466 = vector.multi_reduction <add>, %465, %cst_74 [1] : vector<5x256xf32> to vector<5xf32>
    %467 = vector.shape_cast %466 : vector<5xf32> to vector<5x1xf32>
    %468 = vector.extract_strided_slice %467 {offsets = [0, 0], sizes = [1, 1], strides = [1, 1]} : vector<5x1xf32> to vector<1x1xf32>
    %469 = vector.extract_strided_slice %467 {offsets = [1, 0], sizes = [1, 1], strides = [1, 1]} : vector<5x1xf32> to vector<1x1xf32>
    %470 = vector.extract_strided_slice %467 {offsets = [2, 0], sizes = [1, 1], strides = [1, 1]} : vector<5x1xf32> to vector<1x1xf32>
    %471 = vector.extract_strided_slice %467 {offsets = [3, 0], sizes = [1, 1], strides = [1, 1]} : vector<5x1xf32> to vector<1x1xf32>
    %472 = vector.extract_strided_slice %467 {offsets = [4, 0], sizes = [1, 1], strides = [1, 1]} : vector<5x1xf32> to vector<1x1xf32>
    %473 = vector.broadcast %c7_i32 : i32 to vector<1x8xi32>
    %474 = arith.cmpi eq, %52, %473 : vector<1x8xi32>
    %475 = vector.broadcast %457 : i1 to vector<1x8xi1>
    %476 = arith.andi %474, %475 : vector<1x8xi1>
    %477 = vector.extract_strided_slice %467 {offsets = [0, 0], sizes = [4, 1], strides = [1, 1]} : vector<5x1xf32> to vector<4x1xf32>
    %478 = vector.shape_cast %476 : vector<1x8xi1> to vector<1x8xi1>
    %479 = vector.broadcast %478 : vector<1x8xi1> to vector<4x8xi1>
    %480 = vector.shape_cast %477 : vector<4x1xf32> to vector<4x1xf32>
    %481 = vector.broadcast %480 : vector<4x1xf32> to vector<4x8xf32>
    %482 = arith.select %479, %481, %425 : vector<4x8xi1>, vector<4x8xf32>
    %483 = arith.extui %457 : i1 to i32
    %484 = arith.addi %427, %483 : i32
    %485 = vector.broadcast %468 : vector<1x1xf32> to vector<1x256xf32>
    %486 = arith.maximumf %42, %485 : vector<1x256xf32>
    %487 = vector.broadcast %469 : vector<1x1xf32> to vector<1x256xf32>
    %488 = arith.maximumf %45, %487 : vector<1x256xf32>
    %489 = vector.broadcast %470 : vector<1x1xf32> to vector<1x256xf32>
    %490 = arith.minimumf %46, %489 : vector<1x256xf32>
    %491 = vector.broadcast %471 : vector<1x1xf32> to vector<1x256xf32>
    %492 = arith.minimumf %47, %491 : vector<1x256xf32>
    %493 = arith.subf %490, %486 : vector<1x256xf32>
    %cst_75 = arith.constant 0.000000e+00 : f32
    %494 = vector.broadcast %cst_75 : f32 to vector<1x256xf32>
    %495 = arith.maximumf %493, %494 : vector<1x256xf32>
    %496 = arith.subf %492, %488 : vector<1x256xf32>
    %cst_76 = arith.constant 0.000000e+00 : f32
    %497 = vector.broadcast %cst_76 : f32 to vector<1x256xf32>
    %498 = arith.maximumf %496, %497 : vector<1x256xf32>
    %499 = arith.mulf %495, %498 : vector<1x256xf32>
    %500 = vector.broadcast %472 : vector<1x1xf32> to vector<1x256xf32>
    %501 = arith.addf %500, %50 : vector<1x256xf32>
    %502 = arith.subf %501, %499 : vector<1x256xf32>
    %503 = arith.divf %499, %502 : vector<1x256xf32>
    %cst_77 = arith.constant 6.000000e-01 : f32
    %504 = vector.broadcast %cst_77 : f32 to vector<1x256xf32>
    %505 = arith.cmpf ole, %503, %504 : vector<1x256xf32>
    %cst_78 = arith.constant dense<true> : vector<1x256xi1>
    %506 = arith.xori %461, %cst_78 : vector<1x256xi1>
    %507 = arith.andi %505, %506 : vector<1x256xi1>
    %508 = vector.broadcast %c-2147483648_i32 : i32 to vector<1x256xi32>
    %509 = arith.select %507, %452, %508 : vector<1x256xi1>, vector<1x256xi32>
    %c8_i32 = arith.constant 8 : i32
    %c0_79 = arith.constant 0 : index
    %c0_80 = arith.constant 0 : index
    %510 = vector.load %arg1[%c0_79, %c0_80] : memref<4x8xf32, #tpu.memory_space<vmem>>, vector<4x8xf32>
    tpu.vector_store %arg1[%c0_79, %c0_80], %482 {strides = array<i32>} : memref<4x8xf32, #tpu.memory_space<vmem>>, vector<4x8xf32>,
    %c0_81 = arith.constant 0 : index
    %511 = memref.load %arg2[%c0_81] : memref<1xi32, #tpu.memory_space<smem>>
    memref.store %484, %arg2[%c0_81] : memref<1xi32, #tpu.memory_space<smem>>
    return
  }
}

</mosaic_0001>

<llo_original>
// kernel: tpu_custom_call.1
$region0: #{tpu_custom_call.1}
  #allocation0 [shape = 'u32[]', space=smem, size = 0x4, offset = 0x4, fixed_abs, tag = 'smem constant byte address 0x4 - core index']
  #allocation1 [shape = 'u32[144,128]{1,0:T(1,128)}', space=vmem, size = 0x12000, scoped, tag = 'internal scratch']
  %s0 = inlined_call_operand.hbm [shape: f32[16,256], index: 0, kind: input, shape index: {}]
  %s1 = inlined_call_operand.hbm [shape: f32[4,8], index: 1, kind: output, shape index: {0}]
  %s2 = inlined_call_operand.hbm [shape: s32[1], index: 2, kind: output, shape index: {1}]
  %3 = xla_tuple %s1, %s2
  %s4 = sld [smem:[#allocation0]]
  $region26: #{tpu_custom_call.1} parent=0
    _
  %s6 = ssub.s32 1, %s4
  %s7 = scalar_select 0, %s6, %s4
  $region1: #{tpu_custom_call.1} parent=0
    #allocation2 [shape = 'u8[16384]{0}', space=vmem, size = 0x4000, scoped, tag = 'input window, operand 0, single buffered']
    #allocation3 [shape = 's32[1]{0}', space=sflag, size = 0x4, scoped, tag = 'scoped memory for tpu_custom_call.1']
    #allocation4 [shape = 's32[1]{0}', space=sflag, size = 0x4, scoped, tag = 'scoped memory for tpu_custom_call.1']
    #allocation5 [shape = 's32[1]{0}', space=sflag, size = 0x4, scoped, tag = 'scoped memory for tpu_custom_call.1']
    #allocation6 [shape = 'u8[2048]{0}', space=vmem, size = 0x800, scoped, tag = 'output window, operand 0, single buffered']
    #allocation7 [shape = 'u8[512]{0}', space=smem, size = 0x200, scoped, tag = 'output window, operand 1, single buffered']
    %8 = vsyncpa [#allocation3], 0
    %9 = vsyncpa [#allocation4], 0
    %10 = vsyncpa [#allocation5], 0
    // Predicated region
    $region2: #{tpu_custom_call.1} parent=1 // pred_check
      _
    $region3: #{tpu_custom_call.1} parent=1 // pred_check_branch
      %12 = sbr.rel (0) target = $region5
    $region4: #{tpu_custom_call.1} parent=1 // pred_region
      %s14 = ssub.s32 512, 512
      %15 = vsyncadd [#allocation3], %s14
      %s16 = sshll.u32 [#allocation2], 4
      %s17 = int_to_ptr.vmem [resolvable:$true] %s16
      %22 = dma.hbm_to_vmem [thread:$0]  %s0, 512, %s17, [#allocation3], 256, 256, 16
    $region5: #{tpu_custom_call.1} parent=1 // pred_fallthru
      _
    // Predicated region
    $region6: #{tpu_custom_call.1} parent=1 // pred_check
      _
    $region7: #{tpu_custom_call.1} parent=1 // pred_check_branch
      %24 = sbr.rel (0) target = $region9
    $region8: #{tpu_custom_call.1} parent=1 // pred_region
      %25 = dma.done [#allocation3], 512
    $region9: #{tpu_custom_call.1} parent=1 // pred_fallthru
      _
    %v26 = vld [vmem:[#allocation2] sm:$0xff]
    %v27 = vld [vmem:[#allocation2 + $0x8] sm:$0xff]
    %v28 = vld [vmem:[#allocation2 + $0x10] sm:$0xff]
    %v29 = vld [vmem:[#allocation2 + $0x18] sm:$0xff]
    %v32 = vrot.slane %v26, 7
    %v33 = vrot.slane %v27, 7
    %v36 = vsub.f32 %v26, %v32
    %v37 = vsub.f32 %v27, %v33
    %vm40 = vcmp.lt.s32.totalorder %v36, 0
    %vm41 = vcmp.lt.s32.totalorder %v37, 0
    %v42 = vxor.u32 %v36, 2147483647
    %v43 = vxor.u32 %v37, 2147483647
    %v44 = vsel %vm40, %v42, %v36
    %v45 = vsel %vm41, %v43, %v37
    %v46 = vlaneseq
    %v47 = vand.u32 %v46, 127
    %v48 = vadd.s32 %v47, 128
    %v49 = vand.u32 %v44, 4294967040
    %v50 = vand.u32 %v45, 4294967040
    %v51 = vsub.s32 255, %v47
    %v52 = vsub.s32 255, %v48
    %v53 = vor.u32 %v49, %v51
    %v54 = vor.u32 %v50, %v52
    %v57 = vrot.slane %v28, 6
    %v58 = vrot.slane %v29, 6
    %v61 = vsub.f32 %v28, %v57
    %v62 = vsub.f32 %v29, %v58
    %v63 = vmul.f32 %v61, 0.5
    %v64 = vmul.f32 %v62, 0.5
    %v67 = vrot.slane %v63, 2
    %v68 = vrot.slane %v64, 2
    %v71 = vadd.f32 %v28, %v67
    %v72 = vadd.f32 %v29, %v68
    %v73 = vmul.f32 %v26, %v61
    %v74 = vmul.f32 %v27, %v62
    %v77 = vrot.slane %v73, 2
    %v78 = vrot.slane %v74, 2
    %v81 = vadd.f32 %v71, %v77
    %v82 = vadd.f32 %v72, %v78
    %v83 = vmul.f32 %v26, 1.442695
    %v84 = vpow.pop %v83
    %v85 = vmul.f32 %v27, 1.442695
    %v86 = vpow.pop %v85
    %v89 = vrot.slane %v84, 2
    %v90 = vrot.slane %v86, 2
    %v93 = vmul.f32 %v61, %v89
    %v94 = vmul.f32 %v62, %v90
    %v95 = vmul.f32 %v93, 0.5
    %v96 = vmul.f32 %v94, 0.5
    %v99 = vrot.slane %v95, 2
    %v100 = vrot.slane %v96, 2
    %v103 = vsub.f32 %v81, %v99
    %v104 = vsub.f32 %v82, %v100
    %v107 = vrot.slane %v93, 2
    %v108 = vrot.slane %v94, 2
    %v111 = vadd.f32 %v103, %v107
    %v112 = vadd.f32 %v104, %v108
    %v113 = vsub.f32 %v111, %v103
    %v114 = vsub.f32 %v112, %v104
    %v117 = vrot.slane %v113, 1
    %v118 = vrot.slane %v114, 1
    %v121 = vmul.f32 %v113, %v117
    %v122 = vmul.f32 %v114, %v118
    %v125 = vrot.slane %v111, 6
    %v126 = vrot.slane %v112, 6
    %v131 = vrot.slane %v121, 4
    %v132 = vrot.slane %v122, 4
    %vm135 = vcmask 1040384
    %vm136 = vcmask 1041408
    %v137 = vsel %vm136, %v103, %v125
    %v138 = vsel %vm136, %v104, %v126
    %vm139 = vcmask 1042432
    %v140 = vsel %vm139, %v137, %v125
    %v141 = vsel %vm139, %v138, %v126
    %vm142 = vcmask 1043456
    %v143 = vsel %vm142, %v140, %v131
    %v144 = vsel %vm142, %v141, %v132
    %vm145 = vcmask 1041409
    %v146 = vsel %vm145, %v53, 2147483648
    %v147 = vsel %vm145, %v54, 2147483648
    %vm148 = vcmp.gt.s32.totalorder %v146, %v147
    %v149 = vsel %vm148, %v146, %v147
    %v150 = vand.u32 %v149, 65535
    %v151 = vshra.s32 %v149, 16
    %v152 = vcvt.s32.f32 %v150
    %v153 = vcvt.s32.f32 %v151
    %154 = vmax.xlane.f32.xlu0 %v153
    %v155 = vpop.xlane.xlu0 %154
    %vm156 = vcmp.eq.f32.partialorder %v153, %v155
    %v157 = vsel %vm156, %v152, -inf
    %158 = vmax.xlane.f32.xlu0 %v157
    %v159 = vpop.xlane.xlu0 %158
    %v160 = vcvt.f32.s32 %v159
    %v161 = vcvt.f32.s32 %v155
    %v162 = vshll.u32 %v161, 16
    %v163 = vadd.s32 %v162, %v160
    %v164 = vrot.slane %v163, 4
    %vm165 = vcmp.gt.s32.totalorder %v163, %v164
    %v166 = vsel %vm165, %v163, %v164
    %v167 = vrot.slane %v166, 2
    %vm168 = vcmp.gt.s32.totalorder %v166, %v167
    %v169 = vsel %vm168, %v166, %v167
    %v170 = vrot.slane %v169, 1
    %vm171 = vcmp.gt.s32.totalorder %v169, %v170
    %v172 = vsel %vm171, %v169, %v170
    %s173 = vtos %v172
    %p174 = scmp.gt.s32.totalorder %s173, 2147483648
    %s175 = sand.u32 %s173, 255
    %s176 = ssub.s32 255, %s175
    %v177 = vstv %s176
    %vm178 = vcmp.eq.s32.totalorder %v47, %v177
    %vm179 = vcmp.eq.s32.totalorder %v48, %v177
    %v180 = vsel %vm178, 1, 0
    %v181 = vsel %vm179, 1, 0
    %vm182 = vcmp.eq.s32.totalorder %v180, 1
    %vm183 = vcmp.eq.s32.totalorder %v181, 1
    %v184 = vsel %vm182, %v143, 0.0
    %v185 = vsel %vm183, %v144, 0.0
    %vm186 = vcmask 1044480
    %v187 = vsel %vm186, %v184, 0.0
    %v188 = vsel %vm186, %v185, 0.0
    %v189 = vadd.f32 %v187, %v188
    %190 = vadd.xlane.f32.xlu0 %v189
    %v191 = vpop.xlane.xlu0 %190
    %vm192 = vcmp.eq.s32.totalorder %v47, 0
    %s193 = scalar_select %p174, 1, 0
    %v194 = vstv %s193
    %vm195 = vcmp.eq.s32.totalorder %v194, 1
    %vm196 = vmand %vm192, %vm195
    %v197 = vsel %vm196, 1, 0
    %vm198 = vcmp.eq.s32.totalorder %v197, 1
    %v199 = vsel %vm198, %v191, 0.0
    %v200 = vmax.f32 %v103, %v191
    %v201 = vmax.f32 %v104, %v191
    %v203 = vrot.slane %v191, 2
    %v205 = vmin.f32 %v111, %v203
    %v206 = vmin.f32 %v112, %v203
    %v207 = vsub.f32 %v205, %v200
    %v208 = vsub.f32 %v206, %v201
    %v209 = vmax.f32 %v207, 0.0
    %v210 = vmax.f32 %v208, 0.0
    %v213 = vrot.slane %v209, 1
    %v214 = vrot.slane %v210, 1
    %v217 = vmul.f32 %v209, %v213
    %v218 = vmul.f32 %v210, %v214
    %v219 = vadd.f32 %v191, %v131
    %v220 = vadd.f32 %v191, %v132
    %v223 = vrot.slane %v217, 4
    %v224 = vrot.slane %v218, 4
    %v227 = vsub.f32 %v219, %v223
    %v228 = vsub.f32 %v220, %v224
    %v231 = vrot.slane %v227, 4
    %v232 = vrot.slane %v228, 4
    %v235 = vrcp.pop %v231
    %v236 = vmul.f32 %v217, %v235
    %v237 = vrcp.pop %v232
    %v238 = vmul.f32 %v218, %v237
    %vm239 = vcmp.le.f32.partialorder %v236, 0.6
    %vm240 = vcmp.le.f32.partialorder %v238, 0.6
    %vm241 = vmxor %vm178, 1
    %vm242 = vmxor %vm179, 1
    %vm243 = vmand %vm239, %vm241
    %vm244 = vmand %vm240, %vm242
    %v245 = vrot.slane %v53, 1
    %v246 = vrot.slane %v54, 1
    %v247 = vsel %vm243, %v245, 2147483648
    %v248 = vsel %vm244, %v246, 2147483648
    %v249 = vsel %vm135, %v247, 2147483648
    %v250 = vsel %vm135, %v248, 2147483648
    %vm251 = vcmp.gt.s32.totalorder %v249, %v250
    %v252 = vsel %vm251, %v249, %v250
    %v253 = vand.u32 %v252, 65535
    %v254 = vshra.s32 %v252, 16
    %v255 = vcvt.s32.f32 %v253
    %v256 = vcvt.s32.f32 %v254
    %257 = vmax.xlane.f32.xlu0 %v256
    %v258 = vpop.xlane.xlu0 %257
    %vm259 = vcmp.eq.f32.partialorder %v256, %v258
    %v260 = vsel %vm259, %v255, -inf
    %261 = vmax.xlane.f32.xlu0 %v260
    %v262 = vpop.xlane.xlu0 %261
    %v263 = vcvt.f32.s32 %v262
    %v264 = vcvt.f32.s32 %v258
    %v265 = vshll.u32 %v264, 16
    %v266 = vadd.s32 %v265, %v263
    %v267 = vrot.slane %v266, 4
    %vm268 = vcmp.gt.s32.totalorder %v266, %v267
    %v269 = vsel %vm268, %v266, %v267
    %v270 = vrot.slane %v269, 2
    %vm271 = vcmp.gt.s32.totalorder %v269, %v270
    %v272 = vsel %vm271, %v269, %v270
    %v273 = vrot.slane %v272, 1
    %vm274 = vcmp.gt.s32.totalorder %v272, %v273
    %v275 = vsel %vm274, %v272, %v273
    %s276 = vtos %v275
    %p277 = scmp.gt.s32.totalorder %s276, 2147483648
    %s278 = sand.u32 %s276, 255
    %s279 = ssub.s32 255, %s278
    %v280 = vstv %s279
    %vm281 = vcmp.eq.s32.totalorder %v47, %v280
    %vm282 = vcmp.eq.s32.totalorder %v48, %v280
    %v283 = vsel %vm281, 1, 0
    %v284 = vsel %vm282, 1, 0
    %vm285 = vcmp.eq.s32.totalorder %v283, 1
    %vm286 = vcmp.eq.s32.totalorder %v284, 1
    %v287 = vsel %vm285, %v143, 0.0
    %v288 = vsel %vm286, %v144, 0.0
    %v289 = vsel %vm186, %v287, 0.0
    %v290 = vsel %vm186, %v288, 0.0
    %v291 = vadd.f32 %v289, %v290
    %292 = vadd.xlane.f32.xlu0 %v291
    %v293 = vpop.xlane.xlu0 %292
    %vm294 = vcmp.eq.s32.totalorder %v47, 1
    %s295 = scalar_select %p277, 1, 0
    %v296 = vstv %s295
    %vm297 = vcmp.eq.s32.totalorder %v296, 1
    %vm298 = vmand %vm294, %vm297
    %v299 = vsel %vm298, 1, 0
    %vm300 = vcmp.eq.s32.totalorder %v299, 1
    %v301 = vsel %vm300, %v293, %v199
    %s302 = sadd.s32 %s193, %s295
    %v303 = vmax.f32 %v103, %v293
    %v304 = vmax.f32 %v104, %v293
    %v306 = vrot.slane %v293, 2
    %v308 = vmin.f32 %v111, %v306
    %v309 = vmin.f32 %v112, %v306
    %v310 = vsub.f32 %v308, %v303
    %v311 = vsub.f32 %v309, %v304
    %v312 = vmax.f32 %v310, 0.0
    %v313 = vmax.f32 %v311, 0.0
    %v316 = vrot.slane %v312, 1
    %v317 = vrot.slane %v313, 1
    %v320 = vmul.f32 %v312, %v316
    %v321 = vmul.f32 %v313, %v317
    %v322 = vadd.f32 %v293, %v131
    %v323 = vadd.f32 %v293, %v132
    %v326 = vrot.slane %v320, 4
    %v327 = vrot.slane %v321, 4
    %v330 = vsub.f32 %v322, %v326
    %v331 = vsub.f32 %v323, %v327
    %v334 = vrot.slane %v330, 4
    %v335 = vrot.slane %v331, 4
    %v338 = vrcp.pop %v334
    %v339 = vmul.f32 %v320, %v338
    %v340 = vrcp.pop %v335
    %v341 = vmul.f32 %v321, %v340
    %vm342 = vcmp.le.f32.partialorder %v339, 0.6
    %vm343 = vcmp.le.f32.partialorder %v341, 0.6
    %vm344 = vmxor %vm281, 1
    %vm345 = vmxor %vm282, 1
    %vm346 = vmand %vm342, %vm344
    %vm347 = vmand %vm343, %vm345
    %v348 = vsel %vm346, %v247, 2147483648
    %v349 = vsel %vm347, %v248, 2147483648
    %v350 = vsel %vm135, %v348, 2147483648
    %v351 = vsel %vm135, %v349, 2147483648
    %vm352 = vcmp.gt.s32.totalorder %v350, %v351
    %v353 = vsel %vm352, %v350, %v351
    %v354 = vand.u32 %v353, 65535
    %v355 = vshra.s32 %v353, 16
    %v356 = vcvt.s32.f32 %v354
    %v357 = vcvt.s32.f32 %v355
    %358 = vmax.xlane.f32.xlu0 %v357
    %v359 = vpop.xlane.xlu0 %358
    %vm360 = vcmp.eq.f32.partialorder %v357, %v359
    %v361 = vsel %vm360, %v356, -inf
    %362 = vmax.xlane.f32.xlu0 %v361
    %v363 = vpop.xlane.xlu0 %362
    %v364 = vcvt.f32.s32 %v363
    %v365 = vcvt.f32.s32 %v359
    %v366 = vshll.u32 %v365, 16
    %v367 = vadd.s32 %v366, %v364
    %v368 = vrot.slane %v367, 4
    %vm369 = vcmp.gt.s32.totalorder %v367, %v368
    %v370 = vsel %vm369, %v367, %v368
    %v371 = vrot.slane %v370, 2
    %vm372 = vcmp.gt.s32.totalorder %v370, %v371
    %v373 = vsel %vm372, %v370, %v371
    %v374 = vrot.slane %v373, 1
    %vm375 = vcmp.gt.s32.totalorder %v373, %v374
    %v376 = vsel %vm375, %v373, %v374
    %s377 = vtos %v376
    %p378 = scmp.gt.s32.totalorder %s377, 2147483648
    %s379 = sand.u32 %s377, 255
    %s380 = ssub.s32 255, %s379
    %v381 = vstv %s380
    %vm382 = vcmp.eq.s32.totalorder %v47, %v381
    %vm383 = vcmp.eq.s32.totalorder %v48, %v381
    %v384 = vsel %vm382, 1, 0
    %v385 = vsel %vm383, 1, 0
    %vm386 = vcmp.eq.s32.totalorder %v384, 1
    %vm387 = vcmp.eq.s32.totalorder %v385, 1
    %v388 = vsel %vm386, %v143, 0.0
    %v389 = vsel %vm387, %v144, 0.0
    %v390 = vsel %vm186, %v388, 0.0
    %v391 = vsel %vm186, %v389, 0.0
    %v392 = vadd.f32 %v390, %v391
    %393 = vadd.xlane.f32.xlu0 %v392
    %v394 = vpop.xlane.xlu0 %393
    %vm395 = vcmp.eq.s32.totalorder %v47, 2
    %s396 = scalar_select %p378, 1, 0
    %v397 = vstv %s396
    %vm398 = vcmp.eq.s32.totalorder %v397, 1
    %vm399 = vmand %vm395, %vm398
    %v400 = vsel %vm399, 1, 0
    %vm401 = vcmp.eq.s32.totalorder %v400, 1
    %v402 = vsel %vm401, %v394, %v301
    %s403 = sadd.s32 %s302, %s396
    %v404 = vmax.f32 %v103, %v394
    %v405 = vmax.f32 %v104, %v394
    %v407 = vrot.slane %v394, 2
    %v409 = vmin.f32 %v111, %v407
    %v410 = vmin.f32 %v112, %v407
    %v411 = vsub.f32 %v409, %v404
    %v412 = vsub.f32 %v410, %v405
    %v413 = vmax.f32 %v411, 0.0
    %v414 = vmax.f32 %v412, 0.0
    %v417 = vrot.slane %v413, 1
    %v418 = vrot.slane %v414, 1
    %v421 = vmul.f32 %v413, %v417
    %v422 = vmul.f32 %v414, %v418
    %v423 = vadd.f32 %v394, %v131
    %v424 = vadd.f32 %v394, %v132
    %v427 = vrot.slane %v421, 4
    %v428 = vrot.slane %v422, 4
    %v431 = vsub.f32 %v423, %v427
    %v432 = vsub.f32 %v424, %v428
    %v435 = vrot.slane %v431, 4
    %v436 = vrot.slane %v432, 4
    %v439 = vrcp.pop %v435
    %v440 = vmul.f32 %v421, %v439
    %v441 = vrcp.pop %v436
    %v442 = vmul.f32 %v422, %v441
    %vm443 = vcmp.le.f32.partialorder %v440, 0.6
    %vm444 = vcmp.le.f32.partialorder %v442, 0.6
    %vm445 = vmxor %vm382, 1
    %vm446 = vmxor %vm383, 1
    %vm447 = vmand %vm443, %vm445
    %vm448 = vmand %vm444, %vm446
    %v449 = vsel %vm447, %v348, 2147483648
    %v450 = vsel %vm448, %v349, 2147483648
    %v451 = vsel %vm135, %v449, 2147483648
    %v452 = vsel %vm135, %v450, 2147483648
    %vm453 = vcmp.gt.s32.totalorder %v451, %v452
    %v454 = vsel %vm453, %v451, %v452
    %v455 = vand.u32 %v454, 65535
    %v456 = vshra.s32 %v454, 16
    %v457 = vcvt.s32.f32 %v455
    %v458 = vcvt.s32.f32 %v456
    %459 = vmax.xlane.f32.xlu0 %v458
    %v460 = vpop.xlane.xlu0 %459
    %vm461 = vcmp.eq.f32.partialorder %v458, %v460
    %v462 = vsel %vm461, %v457, -inf
    %463 = vmax.xlane.f32.xlu0 %v462
    %v464 = vpop.xlane.xlu0 %463
    %v465 = vcvt.f32.s32 %v464
    %v466 = vcvt.f32.s32 %v460
    %v467 = vshll.u32 %v466, 16
    %v468 = vadd.s32 %v467, %v465
    %v469 = vrot.slane %v468, 4
    %vm470 = vcmp.gt.s32.totalorder %v468, %v469
    %v471 = vsel %vm470, %v468, %v469
    %v472 = vrot.slane %v471, 2
    %vm473 = vcmp.gt.s32.totalorder %v471, %v472
    %v474 = vsel %vm473, %v471, %v472
    %v475 = vrot.slane %v474, 1
    %vm476 = vcmp.gt.s32.totalorder %v474, %v475
    %v477 = vsel %vm476, %v474, %v475
    %s478 = vtos %v477
    %p479 = scmp.gt.s32.totalorder %s478, 2147483648
    %s480 = sand.u32 %s478, 255
    %s481 = ssub.s32 255, %s480
    %v482 = vstv %s481
    %vm483 = vcmp.eq.s32.totalorder %v47, %v482
    %vm484 = vcmp.eq.s32.totalorder %v48, %v482
    %v485 = vsel %vm483, 1, 0
    %v486 = vsel %vm484, 1, 0
    %vm487 = vcmp.eq.s32.totalorder %v485, 1
    %vm488 = vcmp.eq.s32.totalorder %v486, 1
    %v489 = vsel %vm487, %v143, 0.0
    %v490 = vsel %vm488, %v144, 0.0
    %v491 = vsel %vm186, %v489, 0.0
    %v492 = vsel %vm186, %v490, 0.0
    %v493 = vadd.f32 %v491, %v492
    %494 = vadd.xlane.f32.xlu0 %v493
    %v495 = vpop.xlane.xlu0 %494
    %vm496 = vcmp.eq.s32.totalorder %v47, 3
    %s497 = scalar_select %p479, 1, 0
    %v498 = vstv %s497
    %vm499 = vcmp.eq.s32.totalorder %v498, 1
    %vm500 = vmand %vm496, %vm499
    %v501 = vsel %vm500, 1, 0
    %vm502 = vcmp.eq.s32.totalorder %v501, 1
    %v503 = vsel %vm502, %v495, %v402
    %s504 = sadd.s32 %s403, %s497
    %v505 = vmax.f32 %v103, %v495
    %v506 = vmax.f32 %v104, %v495
    %v508 = vrot.slane %v495, 2
    %v510 = vmin.f32 %v111, %v508
    %v511 = vmin.f32 %v112, %v508
    %v512 = vsub.f32 %v510, %v505
    %v513 = vsub.f32 %v511, %v506
    %v514 = vmax.f32 %v512, 0.0
    %v515 = vmax.f32 %v513, 0.0
    %v518 = vrot.slane %v514, 1
    %v519 = vrot.slane %v515, 1
    %v522 = vmul.f32 %v514, %v518
    %v523 = vmul.f32 %v515, %v519
    %v524 = vadd.f32 %v495, %v131
    %v525 = vadd.f32 %v495, %v132
    %v528 = vrot.slane %v522, 4
    %v529 = vrot.slane %v523, 4
    %v532 = vsub.f32 %v524, %v528
    %v533 = vsub.f32 %v525, %v529
    %v536 = vrot.slane %v532, 4
    %v537 = vrot.slane %v533, 4
    %v540 = vrcp.pop %v536
    %v541 = vmul.f32 %v522, %v540
    %v542 = vrcp.pop %v537
    %v543 = vmul.f32 %v523, %v542
    %vm544 = vcmp.le.f32.partialorder %v541, 0.6
    %vm545 = vcmp.le.f32.partialorder %v543, 0.6
    %vm546 = vmxor %vm483, 1
    %vm547 = vmxor %vm484, 1
    %vm548 = vmand %vm544, %vm546
    %vm549 = vmand %vm545, %vm547
    %v550 = vsel %vm548, %v449, 2147483648
    %v551 = vsel %vm549, %v450, 2147483648
    %v552 = vsel %vm135, %v550, 2147483648
    %v553 = vsel %vm135, %v551, 2147483648
    %vm554 = vcmp.gt.s32.totalorder %v552, %v553
    %v555 = vsel %vm554, %v552, %v553
    %v556 = vand.u32 %v555, 65535
    %v557 = vshra.s32 %v555, 16
    %v558 = vcvt.s32.f32 %v556
    %v559 = vcvt.s32.f32 %v557
    %560 = vmax.xlane.f32.xlu0 %v559
    %v561 = vpop.xlane.xlu0 %560
    %vm562 = vcmp.eq.f32.partialorder %v559, %v561
    %v563 = vsel %vm562, %v558, -inf
    %564 = vmax.xlane.f32.xlu0 %v563
    %v565 = vpop.xlane.xlu0 %564
    %v566 = vcvt.f32.s32 %v565
    %v567 = vcvt.f32.s32 %v561
    %v568 = vshll.u32 %v567, 16
    %v569 = vadd.s32 %v568, %v566
    %v570 = vrot.slane %v569, 4
    %vm571 = vcmp.gt.s32.totalorder %v569, %v570
    %v572 = vsel %vm571, %v569, %v570
    %v573 = vrot.slane %v572, 2
    %vm574 = vcmp.gt.s32.totalorder %v572, %v573
    %v575 = vsel %vm574, %v572, %v573
    %v576 = vrot.slane %v575, 1
    %vm577 = vcmp.gt.s32.totalorder %v575, %v576
    %v578 = vsel %vm577, %v575, %v576
    %s579 = vtos %v578
    %p580 = scmp.gt.s32.totalorder %s579, 2147483648
    %s581 = sand.u32 %s579, 255
    %s582 = ssub.s32 255, %s581
    %v583 = vstv %s582
    %vm584 = vcmp.eq.s32.totalorder %v47, %v583
    %vm585 = vcmp.eq.s32.totalorder %v48, %v583
    %v586 = vsel %vm584, 1, 0
    %v587 = vsel %vm585, 1, 0
    %vm588 = vcmp.eq.s32.totalorder %v586, 1
    %vm589 = vcmp.eq.s32.totalorder %v587, 1
    %v590 = vsel %vm588, %v143, 0.0
    %v591 = vsel %vm589, %v144, 0.0
    %v592 = vsel %vm186, %v590, 0.0
    %v593 = vsel %vm186, %v591, 0.0
    %v594 = vadd.f32 %v592, %v593
    %595 = vadd.xlane.f32.xlu0 %v594
    %v596 = vpop.xlane.xlu0 %595
    %vm597 = vcmp.eq.s32.totalorder %v47, 4
    %s598 = scalar_select %p580, 1, 0
    %v599 = vstv %s598
    %vm600 = vcmp.eq.s32.totalorder %v599, 1
    %vm601 = vmand %vm597, %vm600
    %v602 = vsel %vm601, 1, 0
    %vm603 = vcmp.eq.s32.totalorder %v602, 1
    %v604 = vsel %vm603, %v596, %v503
    %s605 = sadd.s32 %s504, %s598
    %v606 = vmax.f32 %v103, %v596
    %v607 = vmax.f32 %v104, %v596
    %v609 = vrot.slane %v596, 2
    %v611 = vmin.f32 %v111, %v609
    %v612 = vmin.f32 %v112, %v609
    %v613 = vsub.f32 %v611, %v606
    %v614 = vsub.f32 %v612, %v607
    %v615 = vmax.f32 %v613, 0.0
    %v616 = vmax.f32 %v614, 0.0
    %v619 = vrot.slane %v615, 1
    %v620 = vrot.slane %v616, 1
    %v623 = vmul.f32 %v615, %v619
    %v624 = vmul.f32 %v616, %v620
    %v625 = vadd.f32 %v596, %v131
    %v626 = vadd.f32 %v596, %v132
    %v629 = vrot.slane %v623, 4
    %v630 = vrot.slane %v624, 4
    %v633 = vsub.f32 %v625, %v629
    %v634 = vsub.f32 %v626, %v630
    %v637 = vrot.slane %v633, 4
    %v638 = vrot.slane %v634, 4
    %v641 = vrcp.pop %v637
    %v642 = vmul.f32 %v623, %v641
    %v643 = vrcp.pop %v638
    %v644 = vmul.f32 %v624, %v643
    %vm645 = vcmp.le.f32.partialorder %v642, 0.6
    %vm646 = vcmp.le.f32.partialorder %v644, 0.6
    %vm647 = vmxor %vm584, 1
    %vm648 = vmxor %vm585, 1
    %vm649 = vmand %vm645, %vm647
    %vm650 = vmand %vm646, %vm648
    %v651 = vsel %vm649, %v550, 2147483648
    %v652 = vsel %vm650, %v551, 2147483648
    %v653 = vsel %vm135, %v651, 2147483648
    %v654 = vsel %vm135, %v652, 2147483648
    %vm655 = vcmp.gt.s32.totalorder %v653, %v654
    %v656 = vsel %vm655, %v653, %v654
    %v657 = vand.u32 %v656, 65535
    %v658 = vshra.s32 %v656, 16
    %v659 = vcvt.s32.f32 %v657
    %v660 = vcvt.s32.f32 %v658
    %661 = vmax.xlane.f32.xlu0 %v660
    %v662 = vpop.xlane.xlu0 %661
    %vm663 = vcmp.eq.f32.partialorder %v660, %v662
    %v664 = vsel %vm663, %v659, -inf
    %665 = vmax.xlane.f32.xlu0 %v664
    %v666 = vpop.xlane.xlu0 %665
    %v667 = vcvt.f32.s32 %v666
    %v668 = vcvt.f32.s32 %v662
    %v669 = vshll.u32 %v668, 16
    %v670 = vadd.s32 %v669, %v667
    %v671 = vrot.slane %v670, 4
    %vm672 = vcmp.gt.s32.totalorder %v670, %v671
    %v673 = vsel %vm672, %v670, %v671
    %v674 = vrot.slane %v673, 2
    %vm675 = vcmp.gt.s32.totalorder %v673, %v674
    %v676 = vsel %vm675, %v673, %v674
    %v677 = vrot.slane %v676, 1
    %vm678 = vcmp.gt.s32.totalorder %v676, %v677
    %v679 = vsel %vm678, %v676, %v677
    %s680 = vtos %v679
    %p681 = scmp.gt.s32.totalorder %s680, 2147483648
    %s682 = sand.u32 %s680, 255
    %s683 = ssub.s32 255, %s682
    %v684 = vstv %s683
    %vm685 = vcmp.eq.s32.totalorder %v47, %v684
    %vm686 = vcmp.eq.s32.totalorder %v48, %v684
    %v687 = vsel %vm685, 1, 0
    %v688 = vsel %vm686, 1, 0
    %vm689 = vcmp.eq.s32.totalorder %v687, 1
    %vm690 = vcmp.eq.s32.totalorder %v688, 1
    %v691 = vsel %vm689, %v143, 0.0
    %v692 = vsel %vm690, %v144, 0.0
    %v693 = vsel %vm186, %v691, 0.0
    %v694 = vsel %vm186, %v692, 0.0
    %v695 = vadd.f32 %v693, %v694
    %696 = vadd.xlane.f32.xlu0 %v695
    %v697 = vpop.xlane.xlu0 %696
    %vm698 = vcmp.eq.s32.totalorder %v47, 5
    %s699 = scalar_select %p681, 1, 0
    %v700 = vstv %s699
    %vm701 = vcmp.eq.s32.totalorder %v700, 1
    %vm702 = vmand %vm698, %vm701
    %v703 = vsel %vm702, 1, 0
    %vm704 = vcmp.eq.s32.totalorder %v703, 1
    %v705 = vsel %vm704, %v697, %v604
    %s706 = sadd.s32 %s605, %s699
    %v707 = vmax.f32 %v103, %v697
    %v708 = vmax.f32 %v104, %v697
    %v710 = vrot.slane %v697, 2
    %v712 = vmin.f32 %v111, %v710
    %v713 = vmin.f32 %v112, %v710
    %v714 = vsub.f32 %v712, %v707
    %v715 = vsub.f32 %v713, %v708
    %v716 = vmax.f32 %v714, 0.0
    %v717 = vmax.f32 %v715, 0.0
    %v720 = vrot.slane %v716, 1
    %v721 = vrot.slane %v717, 1
    %v724 = vmul.f32 %v716, %v720
    %v725 = vmul.f32 %v717, %v721
    %v726 = vadd.f32 %v697, %v131
    %v727 = vadd.f32 %v697, %v132
    %v730 = vrot.slane %v724, 4
    %v731 = vrot.slane %v725, 4
    %v734 = vsub.f32 %v726, %v730
    %v735 = vsub.f32 %v727, %v731
    %v738 = vrot.slane %v734, 4
    %v739 = vrot.slane %v735, 4
    %v742 = vrcp.pop %v738
    %v743 = vmul.f32 %v724, %v742
    %v744 = vrcp.pop %v739
    %v745 = vmul.f32 %v725, %v744
    %vm746 = vcmp.le.f32.partialorder %v743, 0.6
    %vm747 = vcmp.le.f32.partialorder %v745, 0.6
    %vm748 = vmxor %vm685, 1
    %vm749 = vmxor %vm686, 1
    %vm750 = vmand %vm746, %vm748
    %vm751 = vmand %vm747, %vm749
    %v752 = vsel %vm750, %v651, 2147483648
    %v753 = vsel %vm751, %v652, 2147483648
    %v754 = vsel %vm135, %v752, 2147483648
    %v755 = vsel %vm135, %v753, 2147483648
    %vm756 = vcmp.gt.s32.totalorder %v754, %v755
    %v757 = vsel %vm756, %v754, %v755
    %v758 = vand.u32 %v757, 65535
    %v759 = vshra.s32 %v757, 16
    %v760 = vcvt.s32.f32 %v758
    %v761 = vcvt.s32.f32 %v759
    %762 = vmax.xlane.f32.xlu0 %v761
    %v763 = vpop.xlane.xlu0 %762
    %vm764 = vcmp.eq.f32.partialorder %v761, %v763
    %v765 = vsel %vm764, %v760, -inf
    %766 = vmax.xlane.f32.xlu0 %v765
    %v767 = vpop.xlane.xlu0 %766
    %v768 = vcvt.f32.s32 %v767
    %v769 = vcvt.f32.s32 %v763
    %v770 = vshll.u32 %v769, 16
    %v771 = vadd.s32 %v770, %v768
    %v772 = vrot.slane %v771, 4
    %vm773 = vcmp.gt.s32.totalorder %v771, %v772
    %v774 = vsel %vm773, %v771, %v772
    %v775 = vrot.slane %v774, 2
    %vm776 = vcmp.gt.s32.totalorder %v774, %v775
    %v777 = vsel %vm776, %v774, %v775
    %v778 = vrot.slane %v777, 1
    %vm779 = vcmp.gt.s32.totalorder %v777, %v778
    %v780 = vsel %vm779, %v777, %v778
    %s781 = vtos %v780
    %p782 = scmp.gt.s32.totalorder %s781, 2147483648
    %s783 = sand.u32 %s781, 255
    %s784 = ssub.s32 255, %s783
    %v785 = vstv %s784
    %vm786 = vcmp.eq.s32.totalorder %v47, %v785
    %vm787 = vcmp.eq.s32.totalorder %v48, %v785
    %v788 = vsel %vm786, 1, 0
    %v789 = vsel %vm787, 1, 0
    %vm790 = vcmp.eq.s32.totalorder %v788, 1
    %vm791 = vcmp.eq.s32.totalorder %v789, 1
    %v792 = vsel %vm790, %v143, 0.0
    %v793 = vsel %vm791, %v144, 0.0
    %v794 = vsel %vm186, %v792, 0.0
    %v795 = vsel %vm186, %v793, 0.0
    %v796 = vadd.f32 %v794, %v795
    %797 = vadd.xlane.f32.xlu0 %v796
    %v798 = vpop.xlane.xlu0 %797
    %vm799 = vcmp.eq.s32.totalorder %v47, 6
    %s800 = scalar_select %p782, 1, 0
    %v801 = vstv %s800
    %vm802 = vcmp.eq.s32.totalorder %v801, 1
    %vm803 = vmand %vm799, %vm802
    %v804 = vsel %vm803, 1, 0
    %vm805 = vcmp.eq.s32.totalorder %v804, 1
    %v806 = vsel %vm805, %v798, %v705
    %s807 = sadd.s32 %s706, %s800
    %v808 = vmax.f32 %v103, %v798
    %v809 = vmax.f32 %v104, %v798
    %v811 = vrot.slane %v798, 2
    %v813 = vmin.f32 %v111, %v811
    %v814 = vmin.f32 %v112, %v811
    %v815 = vsub.f32 %v813, %v808
    %v816 = vsub.f32 %v814, %v809
    %v817 = vmax.f32 %v815, 0.0
    %v818 = vmax.f32 %v816, 0.0
    %v821 = vrot.slane %v817, 1
    %v822 = vrot.slane %v818, 1
    %v825 = vmul.f32 %v817, %v821
    %v826 = vmul.f32 %v818, %v822
    %v827 = vadd.f32 %v798, %v131
    %v828 = vadd.f32 %v798, %v132
    %v831 = vrot.slane %v825, 4
    %v832 = vrot.slane %v826, 4
    %v835 = vsub.f32 %v827, %v831
    %v836 = vsub.f32 %v828, %v832
    %v839 = vrot.slane %v835, 4
    %v840 = vrot.slane %v836, 4
    %v843 = vrcp.pop %v839
    %v844 = vmul.f32 %v825, %v843
    %v845 = vrcp.pop %v840
    %v846 = vmul.f32 %v826, %v845
    %vm847 = vcmp.le.f32.partialorder %v844, 0.6
    %vm848 = vcmp.le.f32.partialorder %v846, 0.6
    %vm849 = vmxor %vm786, 1
    %vm850 = vmxor %vm787, 1
    %vm851 = vmand %vm847, %vm849
    %vm852 = vmand %vm848, %vm850
    %v853 = vsel %vm851, %v752, 2147483648
    %v854 = vsel %vm852, %v753, 2147483648
    %v855 = vsel %vm135, %v853, 2147483648
    %v856 = vsel %vm135, %v854, 2147483648
    %vm857 = vcmp.gt.s32.totalorder %v855, %v856
    %v858 = vsel %vm857, %v855, %v856
    %v859 = vand.u32 %v858, 65535
    %v860 = vshra.s32 %v858, 16
    %v861 = vcvt.s32.f32 %v859
    %v862 = vcvt.s32.f32 %v860
    %863 = vmax.xlane.f32.xlu0 %v862
    %v864 = vpop.xlane.xlu0 %863
    %vm865 = vcmp.eq.f32.partialorder %v862, %v864
    %v866 = vsel %vm865, %v861, -inf
    %867 = vmax.xlane.f32.xlu0 %v866
    %v868 = vpop.xlane.xlu0 %867
    %v869 = vcvt.f32.s32 %v868
    %v870 = vcvt.f32.s32 %v864
    %v871 = vshll.u32 %v870, 16
    %v872 = vadd.s32 %v871, %v869
    %v873 = vrot.slane %v872, 4
    %vm874 = vcmp.gt.s32.totalorder %v872, %v873
    %v875 = vsel %vm874, %v872, %v873
    %v876 = vrot.slane %v875, 2
    %vm877 = vcmp.gt.s32.totalorder %v875, %v876
    %v878 = vsel %vm877, %v875, %v876
    %v879 = vrot.slane %v878, 1
    %vm880 = vcmp.gt.s32.totalorder %v878, %v879
    %v881 = vsel %vm880, %v878, %v879
    %s882 = vtos %v881
    %p883 = scmp.gt.s32.totalorder %s882, 2147483648
    %s884 = sand.u32 %s882, 255
    %s885 = ssub.s32 255, %s884
    %v886 = vstv %s885
    %vm887 = vcmp.eq.s32.totalorder %v47, %v886
    %vm888 = vcmp.eq.s32.totalorder %v48, %v886
    %v889 = vsel %vm887, 1, 0
    %v890 = vsel %vm888, 1, 0
    %vm891 = vcmp.eq.s32.totalorder %v889, 1
    %vm892 = vcmp.eq.s32.totalorder %v890, 1
    %v893 = vsel %vm891, %v143, 0.0
    %v894 = vsel %vm892, %v144, 0.0
    %v895 = vsel %vm186, %v893, 0.0
    %v896 = vsel %vm186, %v894, 0.0
    %v897 = vadd.f32 %v895, %v896
    %898 = vadd.xlane.f32.xlu0 %v897
    %v899 = vpop.xlane.xlu0 %898
    %vm900 = vcmp.eq.s32.totalorder %v47, 7
    %s901 = scalar_select %p883, 1, 0
    %v902 = vstv %s901
    %vm903 = vcmp.eq.s32.totalorder %v902, 1
    %vm904 = vmand %vm900, %vm903
    %v905 = vsel %vm904, 1, 0
    %vm906 = vcmp.eq.s32.totalorder %v905, 1
    %v907 = vsel %vm906, %v899, %v806
    %s908 = sadd.s32 %s807, %s901
    %vm909 = vcmask 60416
    %910 = vst.msk [vmem:[#allocation6] sm:$0xf] %vm909, %v907
    %s911 = scalar_lea.smem [#allocation7], 0
    %912 = sst [smem:[%s911]] %s908
    // Predicated region
    $region10: #{tpu_custom_call.1} parent=1 // pred_check
      _
    $region11: #{tpu_custom_call.1} parent=1 // pred_check_branch
      %914 = sbr.rel (0) target = $region13
    $region12: #{tpu_custom_call.1} parent=1 // pred_region
      %s916 = ssub.s32 64, 64
      %917 = vsyncadd [#allocation4], %s916
      %s919 = sshll.u32 [#allocation6], 4
      %s920 = int_to_ptr.vmem [resolvable:$true] %s919
      %922 = dma.vmem_to_hbm [thread:$0]  %s920, 64, %s1, [#allocation4]
    $region13: #{tpu_custom_call.1} parent=1 // pred_fallthru
      _
    // Predicated region
    $region14: #{tpu_custom_call.1} parent=1 // pred_check
      _
    $region15: #{tpu_custom_call.1} parent=1 // pred_check_branch
      %924 = sbr.rel (0) target = $region17
    $region16: #{tpu_custom_call.1} parent=1 // pred_region
      %s926 = ssub.s32 16, 16
      %927 = vsyncadd [#allocation5], %s926
      %930 = dma.smem_to_hbm [#allocation7], 16, %s2, [#allocation5]
    $region17: #{tpu_custom_call.1} parent=1 // pred_fallthru
      _
    // Predicated region
    $region18: #{tpu_custom_call.1} parent=1 // pred_check
      _
    $region19: #{tpu_custom_call.1} parent=1 // pred_check_branch
      %932 = sbr.rel (0) target = $region21
    $region20: #{tpu_custom_call.1} parent=1 // pred_region
      %933 = dma.done [#allocation4], 64
    $region21: #{tpu_custom_call.1} parent=1 // pred_fallthru
      _
    // Predicated region
    $region22: #{tpu_custom_call.1} parent=1 // pred_check
      _
    $region23: #{tpu_custom_call.1} parent=1 // pred_check_branch
      %935 = sbr.rel (0) target = $region25
    $region24: #{tpu_custom_call.1} parent=1 // pred_region
      %936 = dma.done [#allocation5], 16
    $region25: #{tpu_custom_call.1} parent=1 // pred_fallthru
      _
    %937 = sfence
    %938 = vsyncpa [#allocation3], 1
    %939 = vsyncpa [#allocation4], 1
    %940 = vsyncpa [#allocation5], 1

</llo_original>
